<compile_context>
chip_gen: v6e
topology: v6e:2x2x1
jax: 0.10.0
libtpu: 0.0.40
codegen_flags: <defaults>
</compile_context>

<pallas_src>
import jax
import jax.numpy as jnp
from jax import lax
from jax.experimental import pallas as pl
from jax.experimental.pallas import tpu as pltpu

KSIZE = 33
PAD = 16
EPS = 1e-8


def _localnorm_kernel(x_ref, ah_ref, bbd_ref, o_ref):
    """x_ref/o_ref: (H, P*W) slab = P planes stacked along lanes.
    ah_ref:  (H, H)     row-normalized H-direction band matrix.
    bbd_ref: (P*W, P*W) block-diagonal of P column-normalized W-direction bands."""
    x = x_ref[...].astype(jnp.float32)       # (H, P*W)
    ah = ah_ref[...]                         # (H, H)
    bbd = bbd_ref[...]                       # (P*W, P*W)

    # local mean = Ah @ x @ Bbd  (count_include_pad=False average pool)
    th = jnp.dot(ah, x, preferred_element_type=jnp.float32)            # H-window
    local_mean = jnp.dot(th, bbd, preferred_element_type=jnp.float32)  # W-window

    centered = x - local_mean
    sq = centered * centered

    sh = jnp.dot(ah, sq, preferred_element_type=jnp.float32)
    local_var = jnp.dot(sh, bbd, preferred_element_type=jnp.float32)
    local_std = jnp.sqrt(local_var)

    o_ref[...] = (centered / (local_std + EPS)).astype(o_ref.dtype)


def _band_matrix(n, halfwidth):
    i = lax.broadcasted_iota(jnp.int32, (n, n), 0)
    j = lax.broadcasted_iota(jnp.int32, (n, n), 1)
    return (jnp.abs(i - j) <= halfwidth).astype(jnp.float32)


def _choose_planes_per_step(nc, w, max_lanes=1024):
    """Largest divisor P of nc with a lane-legal (multiple-of-128) block width
    P*w under a lane/VMEM budget; fall back to the full lane extent (P = nc)."""
    best = None
    for p in range(1, nc + 1):
        if nc % p == 0 and (p * w) % 128 == 0 and p * w <= max_lanes:
            best = p
    return best if best is not None else nc


def local_norm(x):
    """x: (N, C, H, W) float32 -> (N, C, H, W) float32."""
    N, C, H, W = x.shape
    NC = N * C
    P = _choose_planes_per_step(NC, W)

    # Count-normalized band matrices (counts separable for border-clipped windows).
    A = _band_matrix(H, PAD)                              # (H, H)
    B = _band_matrix(W, PAD)                              # (W, W)
    Ah = A / A.sum(axis=1, keepdims=True)                 # H-direction mean weights
    Bw = B / B.sum(axis=0, keepdims=True)                 # W-direction mean weights
    Bbd = jnp.kron(jnp.eye(P, dtype=jnp.float32), Bw)     # (P*W, P*W) block-diag

    # Slab layout: planes stacked along lanes -> (H, NC*W).
    xs = jnp.transpose(x.reshape(NC, H, W), (1, 0, 2)).reshape(H, NC * W)

    ys = pl.pallas_call(
        _localnorm_kernel,
        out_shape=jax.ShapeDtypeStruct((H, NC * W), x.dtype),
        grid_spec=pltpu.PrefetchScalarGridSpec(
            num_scalar_prefetch=0,
            grid=(NC // P,),
            in_specs=[
                pl.BlockSpec((H, P * W), lambda c: (0, c)),
                pl.BlockSpec((H, H), lambda c: (0, 0)),
                pl.BlockSpec((P * W, P * W), lambda c: (0, 0)),
            ],
            out_specs=pl.BlockSpec((H, P * W), lambda c: (0, c)),
        ),
        compiler_params=pltpu.CompilerParams(
            dimension_semantics=("parallel",)
        ),
    )(xs, Ah, Bbd)

    return jnp.transpose(ys.reshape(H, NC, W), (1, 0, 2)).reshape(N, C, H, W)


def local_norm_reference(x):
    """Independent reference via lax.reduce_window (count_include_pad=False)."""
    pad = ((0, 0), (0, 0), (PAD, PAD), (PAD, PAD))
    win = (1, 1, KSIZE, KSIZE)
    strides = (1, 1, 1, 1)

    def avg_pool_no_pad_count(t):
        s = lax.reduce_window(t, 0.0, lax.add, win, strides, pad)
        cnt = lax.reduce_window(jnp.ones_like(t), 0.0, lax.add, win, strides, pad)
        return s / cnt

    local_mean = avg_pool_no_pad_count(x)
    centered = x - local_mean
    local_std = jnp.sqrt(avg_pool_no_pad_count(centered ** 2))
    return centered / (local_std + EPS)


if __name__ == "__main__":
    key = jax.random.PRNGKey(0)
    N, C, H, W = 2, 4, 40, 40   # spatial=40 so the 33x33 window is genuinely local
    x = jax.random.normal(key, (N, C, H, W), dtype=jnp.float32)

    # Module parameters (unused in forward) — deterministic init to mirror __init__.
    num_features = C
    weight = jnp.ones((num_features,), dtype=jnp.float32)
    bias = jnp.zeros((num_features,), dtype=jnp.float32)

    out = jax.block_until_ready(local_norm(x))
    ref = local_norm_reference(x)

    assert out.shape == (N, C, H, W)
    assert jnp.allclose(out, ref, rtol=1e-4, atol=1e-4), "mismatch vs reference"

    print("KERNEL_OK")
</pallas_src>

<mosaic_0001>
module attributes {stable_mosaic.version = 11 : i64} {
  func.func @_localnorm_kernel(%arg0: i32, %arg1: memref<40x320xf32, #tpu.memory_space<vmem>>, %arg2: memref<40x40xf32, #tpu.memory_space<vmem>>, %arg3: memref<320x320xf32, #tpu.memory_space<vmem>>, %arg4: memref<40x320xf32, #tpu.memory_space<vmem>>) attributes {dimension_semantics = [#tpu.dimension_semantics<parallel>], iteration_bounds = array<i64: 1>, scalar_prefetch = 0 : i64, scratch_operands = 0 : i64, tpu.core_type = #tpu.core_type<tc>, window_params = [{transform_indices = @transform_0, window_bounds = array<i64: 40, 320>}, {pipeline_mode = #tpu.pipeline_mode<synchronous>, transform_indices = @transform_1, window_bounds = array<i64: 40, 40>}, {pipeline_mode = #tpu.pipeline_mode<synchronous>, transform_indices = @transform_2, window_bounds = array<i64: 320, 320>}, {transform_indices = @transform_3, window_bounds = array<i64: 40, 320>}]} {
    %c0 = arith.constant 0 : index
    %c0_0 = arith.constant 0 : index
    %0 = vector.load %arg1[%c0, %c0_0] : memref<40x320xf32, #tpu.memory_space<vmem>>, vector<40x320xf32>
    %c0_1 = arith.constant 0 : index
    %c0_2 = arith.constant 0 : index
    %1 = vector.load %arg2[%c0_1, %c0_2] : memref<40x40xf32, #tpu.memory_space<vmem>>, vector<40x40xf32>
    %c0_3 = arith.constant 0 : index
    %c0_4 = arith.constant 0 : index
    %2 = vector.load %arg3[%c0_3, %c0_4] : memref<320x320xf32, #tpu.memory_space<vmem>>, vector<320x320xf32>
    %cst = arith.constant dense<0.000000e+00> : vector<40x320xf32>
    %3 = tpu.matmul %1, %0, %cst {dimension_numbers = #tpu.dot_dimension_numbers<[1], [0], [0], [1], [0, 0, 1, 1], [], []>} : vector<40x40xf32>, vector<40x320xf32>, vector<40x320xf32> -> vector<40x320xf32>
    %cst_5 = arith.constant dense<0.000000e+00> : vector<40x320xf32>
    %4 = tpu.matmul %3, %2, %cst_5 {dimension_numbers = #tpu.dot_dimension_numbers<[1], [0], [0], [1], [0, 0, 1, 1], [], []>} : vector<40x320xf32>, vector<320x320xf32>, vector<40x320xf32> -> vector<40x320xf32>
    %5 = arith.subf %0, %4 : vector<40x320xf32>
    %6 = arith.mulf %5, %5 : vector<40x320xf32>
    %cst_6 = arith.constant dense<0.000000e+00> : vector<40x320xf32>
    %7 = tpu.matmul %1, %6, %cst_6 {dimension_numbers = #tpu.dot_dimension_numbers<[1], [0], [0], [1], [0, 0, 1, 1], [], []>} : vector<40x40xf32>, vector<40x320xf32>, vector<40x320xf32> -> vector<40x320xf32>
    %cst_7 = arith.constant dense<0.000000e+00> : vector<40x320xf32>
    %8 = tpu.matmul %7, %2, %cst_7 {dimension_numbers = #tpu.dot_dimension_numbers<[1], [0], [0], [1], [0, 0, 1, 1], [], []>} : vector<40x320xf32>, vector<320x320xf32>, vector<40x320xf32> -> vector<40x320xf32>
    %9 = math.sqrt %8 : vector<40x320xf32>
    %cst_8 = arith.constant 9.99999993E-9 : f32
    %10 = vector.broadcast %cst_8 : f32 to vector<40x320xf32>
    %11 = arith.addf %9, %10 : vector<40x320xf32>
    %12 = arith.divf %5, %11 : vector<40x320xf32>
    %c0_9 = arith.constant 0 : index
    %c0_10 = arith.constant 0 : index
    %13 = vector.load %arg4[%c0_9, %c0_10] : memref<40x320xf32, #tpu.memory_space<vmem>>, vector<40x320xf32>
    tpu.vector_store %arg4[%c0_9, %c0_10], %12 {strides = array<i32>} : memref<40x320xf32, #tpu.memory_space<vmem>>, vector<40x320xf32>,
    return
  }
  func.func @transform_0(%arg0: i32) -> (i32, i32) {
    %c0_i32 = arith.constant 0 : i32
    %c0_i32_0 = arith.constant 0 : i32
    return %c0_i32, %arg0 : i32, i32
  }
  func.func @transform_1(%arg0: i32) -> (i32, i32) {
    %c0_i32 = arith.constant 0 : i32
    %c0_i32_0 = arith.constant 0 : i32
    %c0_i32_1 = arith.constant 0 : i32
    return %c0_i32, %c0_i32_0 : i32, i32
  }
  func.func @transform_2(%arg0: i32) -> (i32, i32) {
    %c0_i32 = arith.constant 0 : i32
    %c0_i32_0 = arith.constant 0 : i32
    %c0_i32_1 = arith.constant 0 : i32
    return %c0_i32, %c0_i32_0 : i32, i32
  }
  func.func @transform_3(%arg0: i32) -> (i32, i32) {
    %c0_i32 = arith.constant 0 : i32
    %c0_i32_0 = arith.constant 0 : i32
    return %c0_i32, %arg0 : i32, i32
  }
}

</mosaic_0001>

<llo_original>
// kernel: tpu_custom_call.1
$region0: #{tpu_custom_call.1}
  #allocation0 [shape = 'u32[]', space=smem, size = 0x4, offset = 0x4, fixed_abs, tag = 'smem constant byte address 0x4 - core index']
  #allocation1 [shape = 'u32[144,128]{1,0:T(1,128)}', space=vmem, size = 0x12000, scoped, tag = 'internal scratch']
  %s0 = inlined_call_operand.hbm [shape: f32[40,320], index: 0, kind: input, shape index: {}]
  %s1 = inlined_call_operand.hbm [shape: f32[40,40], index: 1, kind: input, shape index: {}]
  %s2 = inlined_call_operand.hbm [shape: f32[320,320], index: 2, kind: input, shape index: {}]
  %s3 = inlined_call_operand.hbm [shape: f32[40,320], index: 3, kind: output, shape index: {}]
  %s4 = sld [smem:[#allocation0]]
  $region34: #{tpu_custom_call.1} parent=0
    _
  %s6 = ssub.s32 1, %s4
  %s7 = scalar_select 0, %s6, %s4
  $region1: #{tpu_custom_call.1} parent=0
    #allocation2 [shape = 'u8[61440]{0}', space=vmem, size = 0xf000, scoped, tag = 'input window, operand 0, single buffered']
    #allocation3 [shape = 's32[1]{0}', space=sflag, size = 0x4, scoped, tag = 'scoped memory for tpu_custom_call.1']
    #allocation4 [shape = 's32[1]{0}', space=sflag, size = 0x4, scoped, tag = 'scoped memory for tpu_custom_call.1']
    #allocation5 [shape = 'u8[20480]{0}', space=vmem, size = 0x5000, scoped, tag = 'input window, operand 1, single buffered']
    #allocation6 [shape = 's32[1]{0}', space=sflag, size = 0x4, scoped, tag = 'scoped memory for tpu_custom_call.1']
    #allocation7 [shape = 'u8[491520]{0}', space=vmem, size = 0x78000, scoped, tag = 'input window, operand 2, single buffered']
    #allocation8 [shape = 'u8[61440]{0}', space=vmem, size = 0xf000, scoped, tag = 'output window, operand 0, single buffered']
    %8 = vsyncpa [#allocation3], 0
    %9 = vsyncpa [#allocation6], 0
    %10 = vsyncpa [#allocation4], 0
    // Predicated region
    $region2: #{tpu_custom_call.1} parent=1 // pred_check
      _
    $region3: #{tpu_custom_call.1} parent=1 // pred_check_branch
      %12 = sbr.rel (0) target = $region5
    $region4: #{tpu_custom_call.1} parent=1 // pred_region
      %s14 = ssub.s32 1920, 1920
      %15 = vsyncadd [#allocation3], %s14
      %s16 = sshll.u32 [#allocation2], 4
      %s17 = int_to_ptr.vmem [resolvable:$true] %s16
      %22 = dma.hbm_to_vmem [thread:$0]  %s0, 1920, %s17, [#allocation3], 384, 384, 24
    $region5: #{tpu_custom_call.1} parent=1 // pred_fallthru
      _
    // Predicated region
    $region6: #{tpu_custom_call.1} parent=1 // pred_check
      _
    $region7: #{tpu_custom_call.1} parent=1 // pred_check_branch
      %24 = sbr.rel (0) target = $region9
    $region8: #{tpu_custom_call.1} parent=1 // pred_region
      %s26 = ssub.s32 640, 640
      %27 = vsyncadd [#allocation6], %s26
      %s28 = sshll.u32 [#allocation5], 4
      %s29 = int_to_ptr.vmem [resolvable:$true] %s28
      %34 = dma.hbm_to_vmem [thread:$0]  %s1, 640, %s29, [#allocation6], 128, 128, 8
    $region9: #{tpu_custom_call.1} parent=1 // pred_fallthru
      _
    // Predicated region
    $region10: #{tpu_custom_call.1} parent=1 // pred_check
      _
    $region11: #{tpu_custom_call.1} parent=1 // pred_check_branch
      %36 = sbr.rel (0) target = $region13
    $region12: #{tpu_custom_call.1} parent=1 // pred_region
      %s38 = ssub.s32 15360, 15360
      %39 = vsyncadd [#allocation6], %s38
      %s40 = sshll.u32 [#allocation7], 4
      %s41 = int_to_ptr.vmem [resolvable:$true] %s40
      %46 = dma.hbm_to_vmem [thread:$0]  %s2, 15360, %s41, [#allocation6], 384, 384, 24
    $region13: #{tpu_custom_call.1} parent=1 // pred_fallthru
      _
    // Predicated region
    $region14: #{tpu_custom_call.1} parent=1 // pred_check
      _
    $region15: #{tpu_custom_call.1} parent=1 // pred_check_branch
      %48 = sbr.rel (0) target = $region17
    $region16: #{tpu_custom_call.1} parent=1 // pred_region
      %49 = dma.done [#allocation3], 1920
    $region17: #{tpu_custom_call.1} parent=1 // pred_fallthru
      _
    // Predicated region
    $region18: #{tpu_custom_call.1} parent=1 // pred_check
      _
    $region19: #{tpu_custom_call.1} parent=1 // pred_check_branch
      %51 = sbr.rel (0) target = $region21
    $region20: #{tpu_custom_call.1} parent=1 // pred_region
      %52 = dma.done [#allocation6], 640
    $region21: #{tpu_custom_call.1} parent=1 // pred_fallthru
      _
    // Predicated region
    $region22: #{tpu_custom_call.1} parent=1 // pred_check
      _
    $region23: #{tpu_custom_call.1} parent=1 // pred_check_branch
      %54 = sbr.rel (0) target = $region25
    $region24: #{tpu_custom_call.1} parent=1 // pred_region
      %55 = dma.done [#allocation6], 15360
    $region25: #{tpu_custom_call.1} parent=1 // pred_fallthru
      _
    %v56 = vld [vmem:[#allocation2] sm:$0xff]
    %v57 = vld [vmem:[#allocation2 + $0x8] sm:$0xff]
    %v58 = vld [vmem:[#allocation2 + $0x10] sm:$0xff]
    %v59 = vld [vmem:[#allocation2 + $0x18] sm:$0xff]
    %v60 = vld [vmem:[#allocation2 + $0x20] sm:$0xff]
    %v61 = vld [vmem:[#allocation2 + $0x28] sm:$0xff]
    %v62 = vld [vmem:[#allocation2 + $0x30] sm:$0xff]
    %v63 = vld [vmem:[#allocation2 + $0x38] sm:$0xff]
    %v64 = vld [vmem:[#allocation2 + $0x40] sm:$0xff]
    %v65 = vld [vmem:[#allocation2 + $0x48] sm:$0xff]
    %v66 = vld [vmem:[#allocation2 + $0x50] sm:$0xff]
    %v67 = vld [vmem:[#allocation2 + $0x58] sm:$0xff]
    %v68 = vld [vmem:[#allocation2 + $0x60] sm:$0xff]
    %v69 = vld [vmem:[#allocation2 + $0x68] sm:$0xff]
    %v70 = vld [vmem:[#allocation2 + $0x70] sm:$0xff]
    %v71 = vld [vmem:[#allocation5] sm:$0xff]
    %v72 = vld [vmem:[#allocation5 + $0x8] sm:$0xff]
    %v73 = vld [vmem:[#allocation5 + $0x10] sm:$0xff]
    %v74 = vld [vmem:[#allocation5 + $0x18] sm:$0xff]
    %v75 = vld [vmem:[#allocation5 + $0x20] sm:$0xff]
    %v76 = vld [vmem:[#allocation7] sm:$0xff]
    %v77 = vld [vmem:[#allocation7 + $0x8] sm:$0xff]
    %v78 = vld [vmem:[#allocation7 + $0x10] sm:$0xff]
    %v79 = vld [vmem:[#allocation7 + $0x18] sm:$0xff]
    %v80 = vld [vmem:[#allocation7 + $0x20] sm:$0xff]
    %v81 = vld [vmem:[#allocation7 + $0x28] sm:$0xff]
    %v82 = vld [vmem:[#allocation7 + $0x30] sm:$0xff]
    %v83 = vld [vmem:[#allocation7 + $0x38] sm:$0xff]
    %v84 = vld [vmem:[#allocation7 + $0x40] sm:$0xff]
    %v85 = vld [vmem:[#allocation7 + $0x48] sm:$0xff]
    %v86 = vld [vmem:[#allocation7 + $0x50] sm:$0xff]
    %v87 = vld [vmem:[#allocation7 + $0x58] sm:$0xff]
    %v88 = vld [vmem:[#allocation7 + $0x60] sm:$0xff]
    %v89 = vld [vmem:[#allocation7 + $0x68] sm:$0xff]
    %v90 = vld [vmem:[#allocation7 + $0x70] sm:$0xff]
    %v91 = vld [vmem:[#allocation7 + $0x78] sm:$0xff]
    %v92 = vld [vmem:[#allocation7 + $0x80] sm:$0xff]
    %v93 = vld [vmem:[#allocation7 + $0x88] sm:$0xff]
    %v94 = vld [vmem:[#allocation7 + $0x90] sm:$0xff]
    %v95 = vld [vmem:[#allocation7 + $0x98] sm:$0xff]
    %v96 = vld [vmem:[#allocation7 + $0xa0] sm:$0xff]
    %v97 = vld [vmem:[#allocation7 + $0xa8] sm:$0xff]
    %v98 = vld [vmem:[#allocation7 + $0xb0] sm:$0xff]
    %v99 = vld [vmem:[#allocation7 + $0xb8] sm:$0xff]
    %v100 = vld [vmem:[#allocation7 + $0xc0] sm:$0xff]
    %v101 = vld [vmem:[#allocation7 + $0xc8] sm:$0xff]
    %v102 = vld [vmem:[#allocation7 + $0xd0] sm:$0xff]
    %v103 = vld [vmem:[#allocation7 + $0xd8] sm:$0xff]
    %v104 = vld [vmem:[#allocation7 + $0xe0] sm:$0xff]
    %v105 = vld [vmem:[#allocation7 + $0xe8] sm:$0xff]
    %v106 = vld [vmem:[#allocation7 + $0xf0] sm:$0xff]
    %v107 = vld [vmem:[#allocation7 + $0xf8] sm:$0xff]
    %v108 = vld [vmem:[#allocation7 + $0x100] sm:$0xff]
    %v109 = vld [vmem:[#allocation7 + $0x108] sm:$0xff]
    %v110 = vld [vmem:[#allocation7 + $0x110] sm:$0xff]
    %v111 = vld [vmem:[#allocation7 + $0x118] sm:$0xff]
    %v112 = vld [vmem:[#allocation7 + $0x120] sm:$0xff]
    %v113 = vld [vmem:[#allocation7 + $0x128] sm:$0xff]
    %v114 = vld [vmem:[#allocation7 + $0x130] sm:$0xff]
    %v115 = vld [vmem:[#allocation7 + $0x138] sm:$0xff]
    %v116 = vld [vmem:[#allocation7 + $0x140] sm:$0xff]
    %v117 = vld [vmem:[#allocation7 + $0x148] sm:$0xff]
    %v118 = vld [vmem:[#allocation7 + $0x150] sm:$0xff]
    %v119 = vld [vmem:[#allocation7 + $0x158] sm:$0xff]
    %v120 = vld [vmem:[#allocation7 + $0x160] sm:$0xff]
    %v121 = vld [vmem:[#allocation7 + $0x168] sm:$0xff]
    %v122 = vld [vmem:[#allocation7 + $0x170] sm:$0xff]
    %v123 = vld [vmem:[#allocation7 + $0x178] sm:$0xff]
    %v124 = vld [vmem:[#allocation7 + $0x180] sm:$0xff]
    %v125 = vld [vmem:[#allocation7 + $0x188] sm:$0xff]
    %v126 = vld [vmem:[#allocation7 + $0x190] sm:$0xff]
    %v127 = vld [vmem:[#allocation7 + $0x198] sm:$0xff]
    %v128 = vld [vmem:[#allocation7 + $0x1a0] sm:$0xff]
    %v129 = vld [vmem:[#allocation7 + $0x1a8] sm:$0xff]
    %v130 = vld [vmem:[#allocation7 + $0x1b0] sm:$0xff]
    %v131 = vld [vmem:[#allocation7 + $0x1b8] sm:$0xff]
    %v132 = vld [vmem:[#allocation7 + $0x1c0] sm:$0xff]
    %v133 = vld [vmem:[#allocation7 + $0x1c8] sm:$0xff]
    %v134 = vld [vmem:[#allocation7 + $0x1d0] sm:$0xff]
    %v135 = vld [vmem:[#allocation7 + $0x1d8] sm:$0xff]
    %v136 = vld [vmem:[#allocation7 + $0x1e0] sm:$0xff]
    %v137 = vld [vmem:[#allocation7 + $0x1e8] sm:$0xff]
    %v138 = vld [vmem:[#allocation7 + $0x1f0] sm:$0xff]
    %v139 = vld [vmem:[#allocation7 + $0x1f8] sm:$0xff]
    %v140 = vld [vmem:[#allocation7 + $0x200] sm:$0xff]
    %v141 = vld [vmem:[#allocation7 + $0x208] sm:$0xff]
    %v142 = vld [vmem:[#allocation7 + $0x210] sm:$0xff]
    %v143 = vld [vmem:[#allocation7 + $0x218] sm:$0xff]
    %v144 = vld [vmem:[#allocation7 + $0x220] sm:$0xff]
    %v145 = vld [vmem:[#allocation7 + $0x228] sm:$0xff]
    %v146 = vld [vmem:[#allocation7 + $0x230] sm:$0xff]
    %v147 = vld [vmem:[#allocation7 + $0x238] sm:$0xff]
    %v148 = vld [vmem:[#allocation7 + $0x240] sm:$0xff]
    %v149 = vld [vmem:[#allocation7 + $0x248] sm:$0xff]
    %v150 = vld [vmem:[#allocation7 + $0x250] sm:$0xff]
    %v151 = vld [vmem:[#allocation7 + $0x258] sm:$0xff]
    %v152 = vld [vmem:[#allocation7 + $0x260] sm:$0xff]
    %v153 = vld [vmem:[#allocation7 + $0x268] sm:$0xff]
    %v154 = vld [vmem:[#allocation7 + $0x270] sm:$0xff]
    %v155 = vld [vmem:[#allocation7 + $0x278] sm:$0xff]
    %v156 = vld [vmem:[#allocation7 + $0x280] sm:$0xff]
    %v157 = vld [vmem:[#allocation7 + $0x288] sm:$0xff]
    %v158 = vld [vmem:[#allocation7 + $0x290] sm:$0xff]
    %v159 = vld [vmem:[#allocation7 + $0x298] sm:$0xff]
    %v160 = vld [vmem:[#allocation7 + $0x2a0] sm:$0xff]
    %v161 = vld [vmem:[#allocation7 + $0x2a8] sm:$0xff]
    %v162 = vld [vmem:[#allocation7 + $0x2b0] sm:$0xff]
    %v163 = vld [vmem:[#allocation7 + $0x2b8] sm:$0xff]
    %v164 = vld [vmem:[#allocation7 + $0x2c0] sm:$0xff]
    %v165 = vld [vmem:[#allocation7 + $0x2c8] sm:$0xff]
    %v166 = vld [vmem:[#allocation7 + $0x2d0] sm:$0xff]
    %v167 = vld [vmem:[#allocation7 + $0x2d8] sm:$0xff]
    %v168 = vld [vmem:[#allocation7 + $0x2e0] sm:$0xff]
    %v169 = vld [vmem:[#allocation7 + $0x2e8] sm:$0xff]
    %v170 = vld [vmem:[#allocation7 + $0x2f0] sm:$0xff]
    %v171 = vld [vmem:[#allocation7 + $0x2f8] sm:$0xff]
    %v172 = vld [vmem:[#allocation7 + $0x300] sm:$0xff]
    %v173 = vld [vmem:[#allocation7 + $0x308] sm:$0xff]
    %v174 = vld [vmem:[#allocation7 + $0x310] sm:$0xff]
    %v175 = vld [vmem:[#allocation7 + $0x318] sm:$0xff]
    %v176 = vld [vmem:[#allocation7 + $0x320] sm:$0xff]
    %v177 = vld [vmem:[#allocation7 + $0x328] sm:$0xff]
    %v178 = vld [vmem:[#allocation7 + $0x330] sm:$0xff]
    %v179 = vld [vmem:[#allocation7 + $0x338] sm:$0xff]
    %v180 = vld [vmem:[#allocation7 + $0x340] sm:$0xff]
    %v181 = vld [vmem:[#allocation7 + $0x348] sm:$0xff]
    %v182 = vld [vmem:[#allocation7 + $0x350] sm:$0xff]
    %v183 = vld [vmem:[#allocation7 + $0x358] sm:$0xff]
    %v184 = vld [vmem:[#allocation7 + $0x360] sm:$0xff]
    %v185 = vld [vmem:[#allocation7 + $0x368] sm:$0xff]
    %v186 = vld [vmem:[#allocation7 + $0x370] sm:$0xff]
    %v187 = vld [vmem:[#allocation7 + $0x378] sm:$0xff]
    %v188 = vld [vmem:[#allocation7 + $0x380] sm:$0xff]
    %v189 = vld [vmem:[#allocation7 + $0x388] sm:$0xff]
    %v190 = vld [vmem:[#allocation7 + $0x390] sm:$0xff]
    %v191 = vld [vmem:[#allocation7 + $0x398] sm:$0xff]
    %v192 = vld [vmem:[#allocation7 + $0x3a0] sm:$0xff]
    %v193 = vld [vmem:[#allocation7 + $0x3a8] sm:$0xff]
    %v194 = vld [vmem:[#allocation7 + $0x3b0] sm:$0xff]
    %v195 = vld [vmem:[#allocation7 + $0x3b8] sm:$0xff]
    %vm196 = vcmask 326656
    %v198 = vsel %vm196, %v71, 0
    %v201 = vsel %vm196, %v72, 0
    %v204 = vsel %vm196, %v73, 0
    %v207 = vsel %vm196, %v74, 0
    %v210 = vsel %vm196, %v75, 0
    %212 = vmatprep.subr.mxu0 0.0
    %213 = vmatpush1.msra.mxu0 0.0
    %214 = vmatprep.subr.mxu0 0.0
    %215 = vmatpush1.msra.mxu0 0.0
    %216 = vmatprep.subr.mxu0 0.0
    %217 = vmatpush1.msra.mxu0 0.0
    %218 = vmatprep.subr.mxu0 0.0
    %219 = vmatpush1.msra.mxu0 0.0
    %220 = vmatprep.subr.mxu0 0.0
    %221 = vmatpush1.msra.mxu0 0.0
    %222 = vmatprep.subr.mxu0 0.0
    %223 = vmatpush1.msra.mxu0 0.0
    %224 = vmatprep.subr.mxu0 0.0
    %225 = vmatpush1.msra.mxu0 0.0
    %226 = vmatprep.subr.mxu0 0.0
    %227 = vmatpush1.msra.mxu0 0.0
    %228 = vmatprep.subr.mxu0 0.0
    %229 = vmatpush1.msra.mxu0 0.0
    %230 = vmatprep.subr.mxu0 0.0
    %231 = vmatpush1.msra.mxu0 0.0
    %232 = vmatprep.subr.mxu0 0.0
    %233 = vmatpush1.msra.mxu0 0.0
    %234 = vmatprep.subr.mxu0 %v69
    %235 = vmatpush1.msra.mxu0 %v68
    %236 = vmatprep.subr.mxu0 %v66
    %237 = vmatpush1.msra.mxu0 %v65
    %238 = vmatprep.subr.mxu0 %v63
    %239 = vmatpush1.msra.mxu0 %v62
    %240 = vmatprep.subr.mxu0 %v60
    %241 = vmatpush1.msra.mxu0 %v59
    %242 = vmatprep.subr.mxu0 %v57
    %243 = vmatpush1.msra.mxu0 %v56
    %244 = vmatprep.subr.mxu0 0.0
    %245 = vmatpush2.msra.mxu0 0.0
    %246 = vmatprep.subr.mxu0 0.0
    %247 = vmatpush2.msra.mxu0 0.0
    %248 = vmatprep.subr.mxu0 0.0
    %249 = vmatpush2.msra.mxu0 0.0
    %250 = vmatprep.subr.mxu0 0.0
    %251 = vmatpush2.msra.mxu0 0.0
    %252 = vmatprep.subr.mxu0 0.0
    %253 = vmatpush2.msra.mxu0 0.0
    %254 = vmatprep.subr.mxu0 0.0
    %255 = vmatpush2.msra.mxu0 0.0
    %256 = vmatprep.subr.mxu0 0.0
    %257 = vmatpush2.msra.mxu0 0.0
    %258 = vmatprep.subr.mxu0 0.0
    %259 = vmatpush2.msra.mxu0 0.0
    %260 = vmatprep.subr.mxu0 0.0
    %261 = vmatpush2.msra.mxu0 0.0
    %262 = vmatprep.subr.mxu0 0.0
    %263 = vmatpush2.msra.mxu0 0.0
    %264 = vmatprep.subr.mxu0 0.0
    %265 = vmatpush2.msra.mxu0 0.0
    %266 = vmatprep.subr.mxu0 0.0
    %267 = vmatpush2.msra.mxu0 0.0
    %268 = vmatprep.subr.mxu0 0.0
    %269 = vmatpush2.msra.mxu0 0.0
    %270 = vmatprep.subr.mxu0 0.0
    %271 = vmatpush2.msra.mxu0 0.0
    %272 = vmatprep.subr.mxu0 0.0
    %273 = vmatpush2.msra.mxu0 0.0
    %274 = vmatprep.subr.mxu0 0.0
    %275 = vmatpush2.msra.mxu0 0.0
    %276 = vmatprep.mubr.f32.mxu0 0.0
    %277 = vmatmul.mubr.f32.gmra.mxu0 %v198
    %v278 = vpop.f32.mrf.mxu0
    %v279 = vadd.f32 0.0, %v278
    %v280 = vpop.f32.mrf.mxu0
    %v281 = vadd.f32 0.0, %v280
    %282 = vmatprep.mubr.f32.mxu0 0.0
    %283 = vmatmul.mubr.f32.gmra.mxu0 %v201
    %v284 = vpop.f32.mrf.mxu0
    %v285 = vadd.f32 0.0, %v284
    %v286 = vpop.f32.mrf.mxu0
    %v287 = vadd.f32 0.0, %v286
    %288 = vmatprep.mubr.f32.mxu0 0.0
    %289 = vmatmul.mubr.f32.gmra.mxu0 %v204
    %v290 = vpop.f32.mrf.mxu0
    %v291 = vadd.f32 0.0, %v290
    %v292 = vpop.f32.mrf.mxu0
    %v293 = vadd.f32 0.0, %v292
    %294 = vmatprep.mubr.f32.mxu0 0.0
    %295 = vmatmul.mubr.f32.gmra.mxu0 %v207
    %v296 = vpop.f32.mrf.mxu0
    %v297 = vadd.f32 0.0, %v296
    %v298 = vpop.f32.mrf.mxu0
    %v299 = vadd.f32 0.0, %v298
    %300 = vmatprep.mubr.f32.mxu0 0.0
    %301 = vmatmul.mubr.f32.gmra.mxu0 %v210
    %v302 = vpop.f32.mrf.mxu0
    %v303 = vadd.f32 0.0, %v302
    %v304 = vpop.f32.mrf.mxu0
    %v305 = vadd.f32 0.0, %v304
    %306 = vdwg.mxu0
    %307 = vmatprep.subr.mxu0 0.0
    %308 = vmatpush1.msra.mxu0 0.0
    %309 = vmatprep.subr.mxu0 0.0
    %310 = vmatpush1.msra.mxu0 0.0
    %311 = vmatprep.subr.mxu0 0.0
    %312 = vmatpush1.msra.mxu0 0.0
    %313 = vmatprep.subr.mxu0 0.0
    %314 = vmatpush1.msra.mxu0 0.0
    %315 = vmatprep.subr.mxu0 0.0
    %316 = vmatpush1.msra.mxu0 0.0
    %317 = vmatprep.subr.mxu0 0.0
    %318 = vmatpush1.msra.mxu0 0.0
    %319 = vmatprep.subr.mxu0 0.0
    %320 = vmatpush1.msra.mxu0 0.0
    %321 = vmatprep.subr.mxu0 0.0
    %322 = vmatpush1.msra.mxu0 0.0
    %323 = vmatprep.subr.mxu0 0.0
    %324 = vmatpush1.msra.mxu0 0.0
    %325 = vmatprep.subr.mxu0 0.0
    %326 = vmatpush1.msra.mxu0 0.0
    %327 = vmatprep.subr.mxu0 0.0
    %328 = vmatpush1.msra.mxu0 0.0
    %329 = vmatprep.subr.mxu0 0.0
    %330 = vmatpush1.msra.mxu0 %v70
    %331 = vmatprep.subr.mxu0 0.0
    %332 = vmatpush1.msra.mxu0 %v67
    %333 = vmatprep.subr.mxu0 0.0
    %334 = vmatpush1.msra.mxu0 %v64
    %335 = vmatprep.subr.mxu0 0.0
    %336 = vmatpush1.msra.mxu0 %v61
    %337 = vmatprep.subr.mxu0 0.0
    %338 = vmatpush1.msra.mxu0 %v58
    %339 = vmatprep.subr.mxu0 0.0
    %340 = vmatpush2.msra.mxu0 0.0
    %341 = vmatprep.subr.mxu0 0.0
    %342 = vmatpush2.msra.mxu0 0.0
    %343 = vmatprep.subr.mxu0 0.0
    %344 = vmatpush2.msra.mxu0 0.0
    %345 = vmatprep.subr.mxu0 0.0
    %346 = vmatpush2.msra.mxu0 0.0
    %347 = vmatprep.subr.mxu0 0.0
    %348 = vmatpush2.msra.mxu0 0.0
    %349 = vmatprep.subr.mxu0 0.0
    %350 = vmatpush2.msra.mxu0 0.0
    %351 = vmatprep.subr.mxu0 0.0
    %352 = vmatpush2.msra.mxu0 0.0
    %353 = vmatprep.subr.mxu0 0.0
    %354 = vmatpush2.msra.mxu0 0.0
    %355 = vmatprep.subr.mxu0 0.0
    %356 = vmatpush2.msra.mxu0 0.0
    %357 = vmatprep.subr.mxu0 0.0
    %358 = vmatpush2.msra.mxu0 0.0
    %359 = vmatprep.subr.mxu0 0.0
    %360 = vmatpush2.msra.mxu0 0.0
    %361 = vmatprep.subr.mxu0 0.0
    %362 = vmatpush2.msra.mxu0 0.0
    %363 = vmatprep.subr.mxu0 0.0
    %364 = vmatpush2.msra.mxu0 0.0
    %365 = vmatprep.subr.mxu0 0.0
    %366 = vmatpush2.msra.mxu0 0.0
    %367 = vmatprep.subr.mxu0 0.0
    %368 = vmatpush2.msra.mxu0 0.0
    %369 = vmatprep.subr.mxu0 0.0
    %370 = vmatpush2.msra.mxu0 0.0
    %371 = vmatprep.mubr.f32.mxu0 0.0
    %372 = vmatmul.mubr.f32.gmra.mxu0 %v198
    %v373 = vpop.f32.mrf.mxu0
    %v374 = vadd.f32 0.0, %v373
    %v375 = vpop.f32.mrf.mxu0
    %376 = vmatprep.mubr.f32.mxu0 0.0
    %377 = vmatmul.mubr.f32.gmra.mxu0 %v201
    %v378 = vpop.f32.mrf.mxu0
    %v379 = vadd.f32 0.0, %v378
    %v380 = vpop.f32.mrf.mxu0
    %381 = vmatprep.mubr.f32.mxu0 0.0
    %382 = vmatmul.mubr.f32.gmra.mxu0 %v204
    %v383 = vpop.f32.mrf.mxu0
    %v384 = vadd.f32 0.0, %v383
    %v385 = vpop.f32.mrf.mxu0
    %386 = vmatprep.mubr.f32.mxu0 0.0
    %387 = vmatmul.mubr.f32.gmra.mxu0 %v207
    %v388 = vpop.f32.mrf.mxu0
    %v389 = vadd.f32 0.0, %v388
    %v390 = vpop.f32.mrf.mxu0
    %391 = vmatprep.mubr.f32.mxu0 0.0
    %392 = vmatmul.mubr.f32.gmra.mxu0 %v210
    %v393 = vpop.f32.mrf.mxu0
    %v394 = vadd.f32 0.0, %v393
    %v395 = vpop.f32.mrf.mxu0
    %396 = vdwg.mxu0
    %vm397 = vcmask 523264
    %v399 = vsel %vm397, %v374, 0
    %v402 = vsel %vm397, %v379, 0
    %v405 = vsel %vm397, %v384, 0
    %v408 = vsel %vm397, %v389, 0
    %v411 = vsel %vm397, %v394, 0
    %413 = vmatprep.subr.mxu0 %v122
    %414 = vmatpush1.msra.mxu0 %v121
    %415 = vmatprep.subr.mxu0 %v119
    %416 = vmatpush1.msra.mxu0 %v118
    %417 = vmatprep.subr.mxu0 %v116
    %418 = vmatpush1.msra.mxu0 %v115
    %419 = vmatprep.subr.mxu0 %v113
    %420 = vmatpush1.msra.mxu0 %v112
    %421 = vmatprep.subr.mxu0 %v110
    %422 = vmatpush1.msra.mxu0 %v109
    %423 = vmatprep.subr.mxu0 %v107
    %424 = vmatpush1.msra.mxu0 %v106
    %425 = vmatprep.subr.mxu0 %v104
    %426 = vmatpush1.msra.mxu0 %v103
    %427 = vmatprep.subr.mxu0 %v101
    %428 = vmatpush1.msra.mxu0 %v100
    %429 = vmatprep.subr.mxu0 %v98
    %430 = vmatpush1.msra.mxu0 %v97
    %431 = vmatprep.subr.mxu0 %v95
    %432 = vmatpush1.msra.mxu0 %v94
    %433 = vmatprep.subr.mxu0 %v92
    %434 = vmatpush1.msra.mxu0 %v91
    %435 = vmatprep.subr.mxu0 %v89
    %436 = vmatpush1.msra.mxu0 %v88
    %437 = vmatprep.subr.mxu0 %v86
    %438 = vmatpush1.msra.mxu0 %v85
    %439 = vmatprep.subr.mxu0 %v83
    %440 = vmatpush1.msra.mxu0 %v82
    %441 = vmatprep.subr.mxu0 %v80
    %442 = vmatpush1.msra.mxu0 %v79
    %443 = vmatprep.subr.mxu0 %v77
    %444 = vmatpush1.msra.mxu0 %v76
    %445 = vmatprep.subr.mxu0 %v170
    %446 = vmatpush2.msra.mxu0 %v169
    %447 = vmatprep.subr.mxu0 %v167
    %448 = vmatpush2.msra.mxu0 %v166
    %449 = vmatprep.subr.mxu0 %v164
    %450 = vmatpush2.msra.mxu0 %v163
    %451 = vmatprep.subr.mxu0 %v161
    %452 = vmatpush2.msra.mxu0 %v160
    %453 = vmatprep.subr.mxu0 %v158
    %454 = vmatpush2.msra.mxu0 %v157
    %455 = vmatprep.subr.mxu0 %v155
    %456 = vmatpush2.msra.mxu0 %v154
    %457 = vmatprep.subr.mxu0 %v152
    %458 = vmatpush2.msra.mxu0 %v151
    %459 = vmatprep.subr.mxu0 %v149
    %460 = vmatpush2.msra.mxu0 %v148
    %461 = vmatprep.subr.mxu0 %v146
    %462 = vmatpush2.msra.mxu0 %v145
    %463 = vmatprep.subr.mxu0 %v143
    %464 = vmatpush2.msra.mxu0 %v142
    %465 = vmatprep.subr.mxu0 %v140
    %466 = vmatpush2.msra.mxu0 %v139
    %467 = vmatprep.subr.mxu0 %v137
    %468 = vmatpush2.msra.mxu0 %v136
    %469 = vmatprep.subr.mxu0 %v134
    %470 = vmatpush2.msra.mxu0 %v133
    %471 = vmatprep.subr.mxu0 %v131
    %472 = vmatpush2.msra.mxu0 %v130
    %473 = vmatprep.subr.mxu0 %v128
    %474 = vmatpush2.msra.mxu0 %v127
    %475 = vmatprep.subr.mxu0 %v125
    %476 = vmatpush2.msra.mxu0 %v124
    %477 = vmatprep.mubr.f32.mxu0 %v281
    %478 = vmatmul.mubr.f32.gmra.mxu0 %v279
    %v479 = vpop.f32.mrf.mxu0
    %v480 = vadd.f32 0.0, %v479
    %v481 = vpop.f32.mrf.mxu0
    %v482 = vadd.f32 0.0, %v481
    %483 = vmatprep.mubr.f32.mxu0 %v287
    %484 = vmatmul.mubr.f32.gmra.mxu0 %v285
    %v485 = vpop.f32.mrf.mxu0
    %v486 = vadd.f32 0.0, %v485
    %v487 = vpop.f32.mrf.mxu0
    %v488 = vadd.f32 0.0, %v487
    %489 = vmatprep.mubr.f32.mxu0 %v293
    %490 = vmatmul.mubr.f32.gmra.mxu0 %v291
    %v491 = vpop.f32.mrf.mxu0
    %v492 = vadd.f32 0.0, %v491
    %v493 = vpop.f32.mrf.mxu0
    %v494 = vadd.f32 0.0, %v493
    %495 = vmatprep.mubr.f32.mxu0 %v299
    %496 = vmatmul.mubr.f32.gmra.mxu0 %v297
    %v497 = vpop.f32.mrf.mxu0
    %v498 = vadd.f32 0.0, %v497
    %v499 = vpop.f32.mrf.mxu0
    %v500 = vadd.f32 0.0, %v499
    %501 = vmatprep.mubr.f32.mxu0 %v305
    %502 = vmatmul.mubr.f32.gmra.mxu0 %v303
    %v503 = vpop.f32.mrf.mxu0
    %v504 = vadd.f32 0.0, %v503
    %v505 = vpop.f32.mrf.mxu0
    %v506 = vadd.f32 0.0, %v505
    %507 = vdwg.mxu0
    %508 = vmatprep.subr.mxu0 0.0
    %509 = vmatpush1.msra.mxu0 0.0
    %510 = vmatprep.subr.mxu0 0.0
    %511 = vmatpush1.msra.mxu0 0.0
    %512 = vmatprep.subr.mxu0 0.0
    %513 = vmatpush1.msra.mxu0 0.0
    %514 = vmatprep.subr.mxu0 0.0
    %515 = vmatpush1.msra.mxu0 0.0
    %516 = vmatprep.subr.mxu0 0.0
    %517 = vmatpush1.msra.mxu0 0.0
    %518 = vmatprep.subr.mxu0 0.0
    %519 = vmatpush1.msra.mxu0 0.0
    %520 = vmatprep.subr.mxu0 0.0
    %521 = vmatpush1.msra.mxu0 0.0
    %522 = vmatprep.subr.mxu0 0.0
    %523 = vmatpush1.msra.mxu0 0.0
    %524 = vmatprep.subr.mxu0 %v194
    %525 = vmatpush1.msra.mxu0 %v193
    %526 = vmatprep.subr.mxu0 %v191
    %527 = vmatpush1.msra.mxu0 %v190
    %528 = vmatprep.subr.mxu0 %v188
    %529 = vmatpush1.msra.mxu0 %v187
    %530 = vmatprep.subr.mxu0 %v185
    %531 = vmatpush1.msra.mxu0 %v184
    %532 = vmatprep.subr.mxu0 %v182
    %533 = vmatpush1.msra.mxu0 %v181
    %534 = vmatprep.subr.mxu0 %v179
    %535 = vmatpush1.msra.mxu0 %v178
    %536 = vmatprep.subr.mxu0 %v176
    %537 = vmatpush1.msra.mxu0 %v175
    %538 = vmatprep.subr.mxu0 %v173
    %539 = vmatpush1.msra.mxu0 %v172
    %540 = vmatprep.subr.mxu0 0.0
    %541 = vmatpush2.msra.mxu0 0.0
    %542 = vmatprep.subr.mxu0 0.0
    %543 = vmatpush2.msra.mxu0 0.0
    %544 = vmatprep.subr.mxu0 0.0
    %545 = vmatpush2.msra.mxu0 0.0
    %546 = vmatprep.subr.mxu0 0.0
    %547 = vmatpush2.msra.mxu0 0.0
    %548 = vmatprep.subr.mxu0 0.0
    %549 = vmatpush2.msra.mxu0 0.0
    %550 = vmatprep.subr.mxu0 0.0
    %551 = vmatpush2.msra.mxu0 0.0
    %552 = vmatprep.subr.mxu0 0.0
    %553 = vmatpush2.msra.mxu0 0.0
    %554 = vmatprep.subr.mxu0 0.0
    %555 = vmatpush2.msra.mxu0 0.0
    %556 = vmatprep.subr.mxu0 0.0
    %557 = vmatpush2.msra.mxu0 0.0
    %558 = vmatprep.subr.mxu0 0.0
    %559 = vmatpush2.msra.mxu0 0.0
    %560 = vmatprep.subr.mxu0 0.0
    %561 = vmatpush2.msra.mxu0 0.0
    %562 = vmatprep.subr.mxu0 0.0
    %563 = vmatpush2.msra.mxu0 0.0
    %564 = vmatprep.subr.mxu0 0.0
    %565 = vmatpush2.msra.mxu0 0.0
    %566 = vmatprep.subr.mxu0 0.0
    %567 = vmatpush2.msra.mxu0 0.0
    %568 = vmatprep.subr.mxu0 0.0
    %569 = vmatpush2.msra.mxu0 0.0
    %570 = vmatprep.subr.mxu0 0.0
    %571 = vmatpush2.msra.mxu0 0.0
    %572 = vmatprep.mubr.f32.mxu0 0.0
    %573 = vmatmul.mubr.f32.gmra.mxu0 %v399
    %v574 = vpop.f32.mrf.mxu0
    %v575 = vadd.f32 %v480, %v574
    %v576 = vpop.f32.mrf.mxu0
    %v577 = vadd.f32 %v482, %v576
    %578 = vmatprep.mubr.f32.mxu0 0.0
    %579 = vmatmul.mubr.f32.gmra.mxu0 %v402
    %v580 = vpop.f32.mrf.mxu0
    %v581 = vadd.f32 %v486, %v580
    %v582 = vpop.f32.mrf.mxu0
    %v583 = vadd.f32 %v488, %v582
    %584 = vmatprep.mubr.f32.mxu0 0.0
    %585 = vmatmul.mubr.f32.gmra.mxu0 %v405
    %v586 = vpop.f32.mrf.mxu0
    %v587 = vadd.f32 %v492, %v586
    %v588 = vpop.f32.mrf.mxu0
    %v589 = vadd.f32 %v494, %v588
    %590 = vmatprep.mubr.f32.mxu0 0.0
    %591 = vmatmul.mubr.f32.gmra.mxu0 %v408
    %v592 = vpop.f32.mrf.mxu0
    %v593 = vadd.f32 %v498, %v592
    %v594 = vpop.f32.mrf.mxu0
    %v595 = vadd.f32 %v500, %v594
    %596 = vmatprep.mubr.f32.mxu0 0.0
    %597 = vmatmul.mubr.f32.gmra.mxu0 %v411
    %v598 = vpop.f32.mrf.mxu0
    %v599 = vadd.f32 %v504, %v598
    %v600 = vpop.f32.mrf.mxu0
    %v601 = vadd.f32 %v506, %v600
    %602 = vdwg.mxu0
    %603 = vmatprep.subr.mxu0 0.0
    %604 = vmatpush1.msra.mxu0 %v123
    %605 = vmatprep.subr.mxu0 0.0
    %606 = vmatpush1.msra.mxu0 %v120
    %607 = vmatprep.subr.mxu0 0.0
    %608 = vmatpush1.msra.mxu0 %v117
    %609 = vmatprep.subr.mxu0 0.0
    %610 = vmatpush1.msra.mxu0 %v114
    %611 = vmatprep.subr.mxu0 0.0
    %612 = vmatpush1.msra.mxu0 %v111
    %613 = vmatprep.subr.mxu0 0.0
    %614 = vmatpush1.msra.mxu0 %v108
    %615 = vmatprep.subr.mxu0 0.0
    %616 = vmatpush1.msra.mxu0 %v105
    %617 = vmatprep.subr.mxu0 0.0
    %618 = vmatpush1.msra.mxu0 %v102
    %619 = vmatprep.subr.mxu0 0.0
    %620 = vmatpush1.msra.mxu0 %v99
    %621 = vmatprep.subr.mxu0 0.0
    %622 = vmatpush1.msra.mxu0 %v96
    %623 = vmatprep.subr.mxu0 0.0
    %624 = vmatpush1.msra.mxu0 %v93
    %625 = vmatprep.subr.mxu0 0.0
    %626 = vmatpush1.msra.mxu0 %v90
    %627 = vmatprep.subr.mxu0 0.0
    %628 = vmatpush1.msra.mxu0 %v87
    %629 = vmatprep.subr.mxu0 0.0
    %630 = vmatpush1.msra.mxu0 %v84
    %631 = vmatprep.subr.mxu0 0.0
    %632 = vmatpush1.msra.mxu0 %v81
    %633 = vmatprep.subr.mxu0 0.0
    %634 = vmatpush1.msra.mxu0 %v78
    %635 = vmatprep.subr.mxu0 0.0
    %636 = vmatpush2.msra.mxu0 %v171
    %637 = vmatprep.subr.mxu0 0.0
    %638 = vmatpush2.msra.mxu0 %v168
    %639 = vmatprep.subr.mxu0 0.0
    %640 = vmatpush2.msra.mxu0 %v165
    %641 = vmatprep.subr.mxu0 0.0
    %642 = vmatpush2.msra.mxu0 %v162
    %643 = vmatprep.subr.mxu0 0.0
    %644 = vmatpush2.msra.mxu0 %v159
    %645 = vmatprep.subr.mxu0 0.0
    %646 = vmatpush2.msra.mxu0 %v156
    %647 = vmatprep.subr.mxu0 0.0
    %648 = vmatpush2.msra.mxu0 %v153
    %649 = vmatprep.subr.mxu0 0.0
    %650 = vmatpush2.msra.mxu0 %v150
    %651 = vmatprep.subr.mxu0 0.0
    %652 = vmatpush2.msra.mxu0 %v147
    %653 = vmatprep.subr.mxu0 0.0
    %654 = vmatpush2.msra.mxu0 %v144
    %655 = vmatprep.subr.mxu0 0.0
    %656 = vmatpush2.msra.mxu0 %v141
    %657 = vmatprep.subr.mxu0 0.0
    %658 = vmatpush2.msra.mxu0 %v138
    %659 = vmatprep.subr.mxu0 0.0
    %660 = vmatpush2.msra.mxu0 %v135
    %661 = vmatprep.subr.mxu0 0.0
    %662 = vmatpush2.msra.mxu0 %v132
    %663 = vmatprep.subr.mxu0 0.0
    %664 = vmatpush2.msra.mxu0 %v129
    %665 = vmatprep.subr.mxu0 0.0
    %666 = vmatpush2.msra.mxu0 %v126
    %667 = vmatprep.mubr.f32.mxu0 %v281
    %668 = vmatmul.mubr.f32.gmra.mxu0 %v279
    %v669 = vpop.f32.mrf.mxu0
    %v670 = vadd.f32 0.0, %v669
    %v671 = vpop.f32.mrf.mxu0
    %672 = vmatprep.mubr.f32.mxu0 %v287
    %673 = vmatmul.mubr.f32.gmra.mxu0 %v285
    %v674 = vpop.f32.mrf.mxu0
    %v675 = vadd.f32 0.0, %v674
    %v676 = vpop.f32.mrf.mxu0
    %677 = vmatprep.mubr.f32.mxu0 %v293
    %678 = vmatmul.mubr.f32.gmra.mxu0 %v291
    %v679 = vpop.f32.mrf.mxu0
    %v680 = vadd.f32 0.0, %v679
    %v681 = vpop.f32.mrf.mxu0
    %682 = vmatprep.mubr.f32.mxu0 %v299
    %683 = vmatmul.mubr.f32.gmra.mxu0 %v297
    %v684 = vpop.f32.mrf.mxu0
    %v685 = vadd.f32 0.0, %v684
    %v686 = vpop.f32.mrf.mxu0
    %687 = vmatprep.mubr.f32.mxu0 %v305
    %688 = vmatmul.mubr.f32.gmra.mxu0 %v303
    %v689 = vpop.f32.mrf.mxu0
    %v690 = vadd.f32 0.0, %v689
    %v691 = vpop.f32.mrf.mxu0
    %692 = vdwg.mxu0
    %693 = vmatprep.subr.mxu0 0.0
    %694 = vmatpush1.msra.mxu0 0.0
    %695 = vmatprep.subr.mxu0 0.0
    %696 = vmatpush1.msra.mxu0 0.0
    %697 = vmatprep.subr.mxu0 0.0
    %698 = vmatpush1.msra.mxu0 0.0
    %699 = vmatprep.subr.mxu0 0.0
    %700 = vmatpush1.msra.mxu0 0.0
    %701 = vmatprep.subr.mxu0 0.0
    %702 = vmatpush1.msra.mxu0 0.0
    %703 = vmatprep.subr.mxu0 0.0
    %704 = vmatpush1.msra.mxu0 0.0
    %705 = vmatprep.subr.mxu0 0.0
    %706 = vmatpush1.msra.mxu0 0.0
    %707 = vmatprep.subr.mxu0 0.0
    %708 = vmatpush1.msra.mxu0 0.0
    %709 = vmatprep.subr.mxu0 0.0
    %710 = vmatpush1.msra.mxu0 %v195
    %711 = vmatprep.subr.mxu0 0.0
    %712 = vmatpush1.msra.mxu0 %v192
    %713 = vmatprep.subr.mxu0 0.0
    %714 = vmatpush1.msra.mxu0 %v189
    %715 = vmatprep.subr.mxu0 0.0
    %716 = vmatpush1.msra.mxu0 %v186
    %717 = vmatprep.subr.mxu0 0.0
    %718 = vmatpush1.msra.mxu0 %v183
    %719 = vmatprep.subr.mxu0 0.0
    %720 = vmatpush1.msra.mxu0 %v180
    %721 = vmatprep.subr.mxu0 0.0
    %722 = vmatpush1.msra.mxu0 %v177
    %723 = vmatprep.subr.mxu0 0.0
    %724 = vmatpush1.msra.mxu0 %v174
    %725 = vmatprep.subr.mxu0 0.0
    %726 = vmatpush2.msra.mxu0 0.0
    %727 = vmatprep.subr.mxu0 0.0
    %728 = vmatpush2.msra.mxu0 0.0
    %729 = vmatprep.subr.mxu0 0.0
    %730 = vmatpush2.msra.mxu0 0.0
    %731 = vmatprep.subr.mxu0 0.0
    %732 = vmatpush2.msra.mxu0 0.0
    %733 = vmatprep.subr.mxu0 0.0
    %734 = vmatpush2.msra.mxu0 0.0
    %735 = vmatprep.subr.mxu0 0.0
    %736 = vmatpush2.msra.mxu0 0.0
    %737 = vmatprep.subr.mxu0 0.0
    %738 = vmatpush2.msra.mxu0 0.0
    %739 = vmatprep.subr.mxu0 0.0
    %740 = vmatpush2.msra.mxu0 0.0
    %741 = vmatprep.subr.mxu0 0.0
    %742 = vmatpush2.msra.mxu0 0.0
    %743 = vmatprep.subr.mxu0 0.0
    %744 = vmatpush2.msra.mxu0 0.0
    %745 = vmatprep.subr.mxu0 0.0
    %746 = vmatpush2.msra.mxu0 0.0
    %747 = vmatprep.subr.mxu0 0.0
    %748 = vmatpush2.msra.mxu0 0.0
    %749 = vmatprep.subr.mxu0 0.0
    %750 = vmatpush2.msra.mxu0 0.0
    %751 = vmatprep.subr.mxu0 0.0
    %752 = vmatpush2.msra.mxu0 0.0
    %753 = vmatprep.subr.mxu0 0.0
    %754 = vmatpush2.msra.mxu0 0.0
    %755 = vmatprep.subr.mxu0 0.0
    %756 = vmatpush2.msra.mxu0 0.0
    %757 = vmatprep.mubr.f32.mxu0 0.0
    %758 = vmatmul.mubr.f32.gmra.mxu0 %v399
    %v759 = vpop.f32.mrf.mxu0
    %v760 = vadd.f32 %v670, %v759
    %v761 = vpop.f32.mrf.mxu0
    %762 = vmatprep.mubr.f32.mxu0 0.0
    %763 = vmatmul.mubr.f32.gmra.mxu0 %v402
    %v764 = vpop.f32.mrf.mxu0
    %v765 = vadd.f32 %v675, %v764
    %v766 = vpop.f32.mrf.mxu0
    %767 = vmatprep.mubr.f32.mxu0 0.0
    %768 = vmatmul.mubr.f32.gmra.mxu0 %v405
    %v769 = vpop.f32.mrf.mxu0
    %v770 = vadd.f32 %v680, %v769
    %v771 = vpop.f32.mrf.mxu0
    %772 = vmatprep.mubr.f32.mxu0 0.0
    %773 = vmatmul.mubr.f32.gmra.mxu0 %v408
    %v774 = vpop.f32.mrf.mxu0
    %v775 = vadd.f32 %v685, %v774
    %v776 = vpop.f32.mrf.mxu0
    %777 = vmatprep.mubr.f32.mxu0 0.0
    %778 = vmatmul.mubr.f32.gmra.mxu0 %v411
    %v779 = vpop.f32.mrf.mxu0
    %v780 = vadd.f32 %v690, %v779
    %v781 = vpop.f32.mrf.mxu0
    %782 = vdwg.mxu0
    %v783 = vsub.f32 %v56, %v575
    %v784 = vsub.f32 %v57, %v577
    %v785 = vsub.f32 %v58, %v760
    %v786 = vsub.f32 %v59, %v581
    %v787 = vsub.f32 %v60, %v583
    %v788 = vsub.f32 %v61, %v765
    %v789 = vsub.f32 %v62, %v587
    %v790 = vsub.f32 %v63, %v589
    %v791 = vsub.f32 %v64, %v770
    %v792 = vsub.f32 %v65, %v593
    %v793 = vsub.f32 %v66, %v595
    %v794 = vsub.f32 %v67, %v775
    %v795 = vsub.f32 %v68, %v599
    %v796 = vsub.f32 %v69, %v601
    %v797 = vsub.f32 %v70, %v780
    %v798 = vmul.f32 %v783, %v783
    %v799 = vmul.f32 %v784, %v784
    %v800 = vmul.f32 %v785, %v785
    %v801 = vmul.f32 %v786, %v786
    %v802 = vmul.f32 %v787, %v787
    %v803 = vmul.f32 %v788, %v788
    %v804 = vmul.f32 %v789, %v789
    %v805 = vmul.f32 %v790, %v790
    %v806 = vmul.f32 %v791, %v791
    %v807 = vmul.f32 %v792, %v792
    %v808 = vmul.f32 %v793, %v793
    %v809 = vmul.f32 %v794, %v794
    %v810 = vmul.f32 %v795, %v795
    %v811 = vmul.f32 %v796, %v796
    %v812 = vmul.f32 %v797, %v797
    %813 = vmatprep.subr.mxu0 0.0
    %814 = vmatpush1.msra.mxu0 0.0
    %815 = vmatprep.subr.mxu0 0.0
    %816 = vmatpush1.msra.mxu0 0.0
    %817 = vmatprep.subr.mxu0 0.0
    %818 = vmatpush1.msra.mxu0 0.0
    %819 = vmatprep.subr.mxu0 0.0
    %820 = vmatpush1.msra.mxu0 0.0
    %821 = vmatprep.subr.mxu0 0.0
    %822 = vmatpush1.msra.mxu0 0.0
    %823 = vmatprep.subr.mxu0 0.0
    %824 = vmatpush1.msra.mxu0 0.0
    %825 = vmatprep.subr.mxu0 0.0
    %826 = vmatpush1.msra.mxu0 0.0
    %827 = vmatprep.subr.mxu0 0.0
    %828 = vmatpush1.msra.mxu0 0.0
    %829 = vmatprep.subr.mxu0 0.0
    %830 = vmatpush1.msra.mxu0 0.0
    %831 = vmatprep.subr.mxu0 0.0
    %832 = vmatpush1.msra.mxu0 0.0
    %833 = vmatprep.subr.mxu0 0.0
    %834 = vmatpush1.msra.mxu0 0.0
    %835 = vmatprep.subr.mxu0 %v811
    %836 = vmatpush1.msra.mxu0 %v810
    %837 = vmatprep.subr.mxu0 %v808
    %838 = vmatpush1.msra.mxu0 %v807
    %839 = vmatprep.subr.mxu0 %v805
    %840 = vmatpush1.msra.mxu0 %v804
    %841 = vmatprep.subr.mxu0 %v802
    %842 = vmatpush1.msra.mxu0 %v801
    %843 = vmatprep.subr.mxu0 %v799
    %844 = vmatpush1.msra.mxu0 %v798
    %845 = vmatprep.subr.mxu0 0.0
    %846 = vmatpush2.msra.mxu0 0.0
    %847 = vmatprep.subr.mxu0 0.0
    %848 = vmatpush2.msra.mxu0 0.0
    %849 = vmatprep.subr.mxu0 0.0
    %850 = vmatpush2.msra.mxu0 0.0
    %851 = vmatprep.subr.mxu0 0.0
    %852 = vmatpush2.msra.mxu0 0.0
    %853 = vmatprep.subr.mxu0 0.0
    %854 = vmatpush2.msra.mxu0 0.0
    %855 = vmatprep.subr.mxu0 0.0
    %856 = vmatpush2.msra.mxu0 0.0
    %857 = vmatprep.subr.mxu0 0.0
    %858 = vmatpush2.msra.mxu0 0.0
    %859 = vmatprep.subr.mxu0 0.0
    %860 = vmatpush2.msra.mxu0 0.0
    %861 = vmatprep.subr.mxu0 0.0
    %862 = vmatpush2.msra.mxu0 0.0
    %863 = vmatprep.subr.mxu0 0.0
    %864 = vmatpush2.msra.mxu0 0.0
    %865 = vmatprep.subr.mxu0 0.0
    %866 = vmatpush2.msra.mxu0 0.0
    %867 = vmatprep.subr.mxu0 0.0
    %868 = vmatpush2.msra.mxu0 0.0
    %869 = vmatprep.subr.mxu0 0.0
    %870 = vmatpush2.msra.mxu0 0.0
    %871 = vmatprep.subr.mxu0 0.0
    %872 = vmatpush2.msra.mxu0 0.0
    %873 = vmatprep.subr.mxu0 0.0
    %874 = vmatpush2.msra.mxu0 0.0
    %875 = vmatprep.subr.mxu0 0.0
    %876 = vmatpush2.msra.mxu0 0.0
    %877 = vmatprep.mubr.f32.mxu0 0.0
    %878 = vmatmul.mubr.f32.gmra.mxu0 %v198
    %v879 = vpop.f32.mrf.mxu0
    %v880 = vadd.f32 0.0, %v879
    %v881 = vpop.f32.mrf.mxu0
    %v882 = vadd.f32 0.0, %v881
    %883 = vmatprep.mubr.f32.mxu0 0.0
    %884 = vmatmul.mubr.f32.gmra.mxu0 %v201
    %v885 = vpop.f32.mrf.mxu0
    %v886 = vadd.f32 0.0, %v885
    %v887 = vpop.f32.mrf.mxu0
    %v888 = vadd.f32 0.0, %v887
    %889 = vmatprep.mubr.f32.mxu0 0.0
    %890 = vmatmul.mubr.f32.gmra.mxu0 %v204
    %v891 = vpop.f32.mrf.mxu0
    %v892 = vadd.f32 0.0, %v891
    %v893 = vpop.f32.mrf.mxu0
    %v894 = vadd.f32 0.0, %v893
    %895 = vmatprep.mubr.f32.mxu0 0.0
    %896 = vmatmul.mubr.f32.gmra.mxu0 %v207
    %v897 = vpop.f32.mrf.mxu0
    %v898 = vadd.f32 0.0, %v897
    %v899 = vpop.f32.mrf.mxu0
    %v900 = vadd.f32 0.0, %v899
    %901 = vmatprep.mubr.f32.mxu0 0.0
    %902 = vmatmul.mubr.f32.gmra.mxu0 %v210
    %v903 = vpop.f32.mrf.mxu0
    %v904 = vadd.f32 0.0, %v903
    %v905 = vpop.f32.mrf.mxu0
    %v906 = vadd.f32 0.0, %v905
    %907 = vdwg.mxu0
    %908 = vmatprep.subr.mxu0 0.0
    %909 = vmatpush1.msra.mxu0 0.0
    %910 = vmatprep.subr.mxu0 0.0
    %911 = vmatpush1.msra.mxu0 0.0
    %912 = vmatprep.subr.mxu0 0.0
    %913 = vmatpush1.msra.mxu0 0.0
    %914 = vmatprep.subr.mxu0 0.0
    %915 = vmatpush1.msra.mxu0 0.0
    %916 = vmatprep.subr.mxu0 0.0
    %917 = vmatpush1.msra.mxu0 0.0
    %918 = vmatprep.subr.mxu0 0.0
    %919 = vmatpush1.msra.mxu0 0.0
    %920 = vmatprep.subr.mxu0 0.0
    %921 = vmatpush1.msra.mxu0 0.0
    %922 = vmatprep.subr.mxu0 0.0
    %923 = vmatpush1.msra.mxu0 0.0
    %924 = vmatprep.subr.mxu0 0.0
    %925 = vmatpush1.msra.mxu0 0.0
    %926 = vmatprep.subr.mxu0 0.0
    %927 = vmatpush1.msra.mxu0 0.0
    %928 = vmatprep.subr.mxu0 0.0
    %929 = vmatpush1.msra.mxu0 0.0
    %930 = vmatprep.subr.mxu0 0.0
    %931 = vmatpush1.msra.mxu0 %v812
    %932 = vmatprep.subr.mxu0 0.0
    %933 = vmatpush1.msra.mxu0 %v809
    %934 = vmatprep.subr.mxu0 0.0
    %935 = vmatpush1.msra.mxu0 %v806
    %936 = vmatprep.subr.mxu0 0.0
    %937 = vmatpush1.msra.mxu0 %v803
    %938 = vmatprep.subr.mxu0 0.0
    %939 = vmatpush1.msra.mxu0 %v800
    %940 = vmatprep.subr.mxu0 0.0
    %941 = vmatpush2.msra.mxu0 0.0
    %942 = vmatprep.subr.mxu0 0.0
    %943 = vmatpush2.msra.mxu0 0.0
    %944 = vmatprep.subr.mxu0 0.0
    %945 = vmatpush2.msra.mxu0 0.0
    %946 = vmatprep.subr.mxu0 0.0
    %947 = vmatpush2.msra.mxu0 0.0
    %948 = vmatprep.subr.mxu0 0.0
    %949 = vmatpush2.msra.mxu0 0.0
    %950 = vmatprep.subr.mxu0 0.0
    %951 = vmatpush2.msra.mxu0 0.0
    %952 = vmatprep.subr.mxu0 0.0
    %953 = vmatpush2.msra.mxu0 0.0
    %954 = vmatprep.subr.mxu0 0.0
    %955 = vmatpush2.msra.mxu0 0.0
    %956 = vmatprep.subr.mxu0 0.0
    %957 = vmatpush2.msra.mxu0 0.0
    %958 = vmatprep.subr.mxu0 0.0
    %959 = vmatpush2.msra.mxu0 0.0
    %960 = vmatprep.subr.mxu0 0.0
    %961 = vmatpush2.msra.mxu0 0.0
    %962 = vmatprep.subr.mxu0 0.0
    %963 = vmatpush2.msra.mxu0 0.0
    %964 = vmatprep.subr.mxu0 0.0
    %965 = vmatpush2.msra.mxu0 0.0
    %966 = vmatprep.subr.mxu0 0.0
    %967 = vmatpush2.msra.mxu0 0.0
    %968 = vmatprep.subr.mxu0 0.0
    %969 = vmatpush2.msra.mxu0 0.0
    %970 = vmatprep.subr.mxu0 0.0
    %971 = vmatpush2.msra.mxu0 0.0
    %972 = vmatprep.mubr.f32.mxu0 0.0
    %973 = vmatmul.mubr.f32.gmra.mxu0 %v198
    %v974 = vpop.f32.mrf.mxu0
    %v975 = vadd.f32 0.0, %v974
    %v976 = vpop.f32.mrf.mxu0
    %977 = vmatprep.mubr.f32.mxu0 0.0
    %978 = vmatmul.mubr.f32.gmra.mxu0 %v201
    %v979 = vpop.f32.mrf.mxu0
    %v980 = vadd.f32 0.0, %v979
    %v981 = vpop.f32.mrf.mxu0
    %982 = vmatprep.mubr.f32.mxu0 0.0
    %983 = vmatmul.mubr.f32.gmra.mxu0 %v204
    %v984 = vpop.f32.mrf.mxu0
    %v985 = vadd.f32 0.0, %v984
    %v986 = vpop.f32.mrf.mxu0
    %987 = vmatprep.mubr.f32.mxu0 0.0
    %988 = vmatmul.mubr.f32.gmra.mxu0 %v207
    %v989 = vpop.f32.mrf.mxu0
    %v990 = vadd.f32 0.0, %v989
    %v991 = vpop.f32.mrf.mxu0
    %992 = vmatprep.mubr.f32.mxu0 0.0
    %993 = vmatmul.mubr.f32.gmra.mxu0 %v210
    %v994 = vpop.f32.mrf.mxu0
    %v995 = vadd.f32 0.0, %v994
    %v996 = vpop.f32.mrf.mxu0
    %997 = vdwg.mxu0
    %v999 = vsel %vm397, %v975, 0
    %v1002 = vsel %vm397, %v980, 0
    %v1005 = vsel %vm397, %v985, 0
    %v1008 = vsel %vm397, %v990, 0
    %v1011 = vsel %vm397, %v995, 0
    %1013 = vmatprep.subr.mxu0 %v122
    %1014 = vmatpush1.msra.mxu0 %v121
    %1015 = vmatprep.subr.mxu0 %v119
    %1016 = vmatpush1.msra.mxu0 %v118
    %1017 = vmatprep.subr.mxu0 %v116
    %1018 = vmatpush1.msra.mxu0 %v115
    %1019 = vmatprep.subr.mxu0 %v113
    %1020 = vmatpush1.msra.mxu0 %v112
    %1021 = vmatprep.subr.mxu0 %v110
    %1022 = vmatpush1.msra.mxu0 %v109
    %1023 = vmatprep.subr.mxu0 %v107
    %1024 = vmatpush1.msra.mxu0 %v106
    %1025 = vmatprep.subr.mxu0 %v104
    %1026 = vmatpush1.msra.mxu0 %v103
    %1027 = vmatprep.subr.mxu0 %v101
    %1028 = vmatpush1.msra.mxu0 %v100
    %1029 = vmatprep.subr.mxu0 %v98
    %1030 = vmatpush1.msra.mxu0 %v97
    %1031 = vmatprep.subr.mxu0 %v95
    %1032 = vmatpush1.msra.mxu0 %v94
    %1033 = vmatprep.subr.mxu0 %v92
    %1034 = vmatpush1.msra.mxu0 %v91
    %1035 = vmatprep.subr.mxu0 %v89
    %1036 = vmatpush1.msra.mxu0 %v88
    %1037 = vmatprep.subr.mxu0 %v86
    %1038 = vmatpush1.msra.mxu0 %v85
    %1039 = vmatprep.subr.mxu0 %v83
    %1040 = vmatpush1.msra.mxu0 %v82
    %1041 = vmatprep.subr.mxu0 %v80
    %1042 = vmatpush1.msra.mxu0 %v79
    %1043 = vmatprep.subr.mxu0 %v77
    %1044 = vmatpush1.msra.mxu0 %v76
    %1045 = vmatprep.subr.mxu0 %v170
    %1046 = vmatpush2.msra.mxu0 %v169
    %1047 = vmatprep.subr.mxu0 %v167
    %1048 = vmatpush2.msra.mxu0 %v166
    %1049 = vmatprep.subr.mxu0 %v164
    %1050 = vmatpush2.msra.mxu0 %v163
    %1051 = vmatprep.subr.mxu0 %v161
    %1052 = vmatpush2.msra.mxu0 %v160
    %1053 = vmatprep.subr.mxu0 %v158
    %1054 = vmatpush2.msra.mxu0 %v157
    %1055 = vmatprep.subr.mxu0 %v155
    %1056 = vmatpush2.msra.mxu0 %v154
    %1057 = vmatprep.subr.mxu0 %v152
    %1058 = vmatpush2.msra.mxu0 %v151
    %1059 = vmatprep.subr.mxu0 %v149
    %1060 = vmatpush2.msra.mxu0 %v148
    %1061 = vmatprep.subr.mxu0 %v146
    %1062 = vmatpush2.msra.mxu0 %v145
    %1063 = vmatprep.subr.mxu0 %v143
    %1064 = vmatpush2.msra.mxu0 %v142
    %1065 = vmatprep.subr.mxu0 %v140
    %1066 = vmatpush2.msra.mxu0 %v139
    %1067 = vmatprep.subr.mxu0 %v137
    %1068 = vmatpush2.msra.mxu0 %v136
    %1069 = vmatprep.subr.mxu0 %v134
    %1070 = vmatpush2.msra.mxu0 %v133
    %1071 = vmatprep.subr.mxu0 %v131
    %1072 = vmatpush2.msra.mxu0 %v130
    %1073 = vmatprep.subr.mxu0 %v128
    %1074 = vmatpush2.msra.mxu0 %v127
    %1075 = vmatprep.subr.mxu0 %v125
    %1076 = vmatpush2.msra.mxu0 %v124
    %1077 = vmatprep.mubr.f32.mxu0 %v882
    %1078 = vmatmul.mubr.f32.gmra.mxu0 %v880
    %v1079 = vpop.f32.mrf.mxu0
    %v1080 = vadd.f32 0.0, %v1079
    %v1081 = vpop.f32.mrf.mxu0
    %v1082 = vadd.f32 0.0, %v1081
    %1083 = vmatprep.mubr.f32.mxu0 %v888
    %1084 = vmatmul.mubr.f32.gmra.mxu0 %v886
    %v1085 = vpop.f32.mrf.mxu0
    %v1086 = vadd.f32 0.0, %v1085
    %v1087 = vpop.f32.mrf.mxu0
    %v1088 = vadd.f32 0.0, %v1087
    %1089 = vmatprep.mubr.f32.mxu0 %v894
    %1090 = vmatmul.mubr.f32.gmra.mxu0 %v892
    %v1091 = vpop.f32.mrf.mxu0
    %v1092 = vadd.f32 0.0, %v1091
    %v1093 = vpop.f32.mrf.mxu0
    %v1094 = vadd.f32 0.0, %v1093
    %1095 = vmatprep.mubr.f32.mxu0 %v900
    %1096 = vmatmul.mubr.f32.gmra.mxu0 %v898
    %v1097 = vpop.f32.mrf.mxu0
    %v1098 = vadd.f32 0.0, %v1097
    %v1099 = vpop.f32.mrf.mxu0
    %v1100 = vadd.f32 0.0, %v1099
    %1101 = vmatprep.mubr.f32.mxu0 %v906
    %1102 = vmatmul.mubr.f32.gmra.mxu0 %v904
    %v1103 = vpop.f32.mrf.mxu0
    %v1104 = vadd.f32 0.0, %v1103
    %v1105 = vpop.f32.mrf.mxu0
    %v1106 = vadd.f32 0.0, %v1105
    %1107 = vdwg.mxu0
    %1108 = vmatprep.subr.mxu0 0.0
    %1109 = vmatpush1.msra.mxu0 0.0
    %1110 = vmatprep.subr.mxu0 0.0
    %1111 = vmatpush1.msra.mxu0 0.0
    %1112 = vmatprep.subr.mxu0 0.0
    %1113 = vmatpush1.msra.mxu0 0.0
    %1114 = vmatprep.subr.mxu0 0.0
    %1115 = vmatpush1.msra.mxu0 0.0
    %1116 = vmatprep.subr.mxu0 0.0
    %1117 = vmatpush1.msra.mxu0 0.0
    %1118 = vmatprep.subr.mxu0 0.0
    %1119 = vmatpush1.msra.mxu0 0.0
    %1120 = vmatprep.subr.mxu0 0.0
    %1121 = vmatpush1.msra.mxu0 0.0
    %1122 = vmatprep.subr.mxu0 0.0
    %1123 = vmatpush1.msra.mxu0 0.0
    %1124 = vmatprep.subr.mxu0 %v194
    %1125 = vmatpush1.msra.mxu0 %v193
    %1126 = vmatprep.subr.mxu0 %v191
    %1127 = vmatpush1.msra.mxu0 %v190
    %1128 = vmatprep.subr.mxu0 %v188
    %1129 = vmatpush1.msra.mxu0 %v187
    %1130 = vmatprep.subr.mxu0 %v185
    %1131 = vmatpush1.msra.mxu0 %v184
    %1132 = vmatprep.subr.mxu0 %v182
    %1133 = vmatpush1.msra.mxu0 %v181
    %1134 = vmatprep.subr.mxu0 %v179
    %1135 = vmatpush1.msra.mxu0 %v178
    %1136 = vmatprep.subr.mxu0 %v176
    %1137 = vmatpush1.msra.mxu0 %v175
    %1138 = vmatprep.subr.mxu0 %v173
    %1139 = vmatpush1.msra.mxu0 %v172
    %1140 = vmatprep.subr.mxu0 0.0
    %1141 = vmatpush2.msra.mxu0 0.0
    %1142 = vmatprep.subr.mxu0 0.0
    %1143 = vmatpush2.msra.mxu0 0.0
    %1144 = vmatprep.subr.mxu0 0.0
    %1145 = vmatpush2.msra.mxu0 0.0
    %1146 = vmatprep.subr.mxu0 0.0
    %1147 = vmatpush2.msra.mxu0 0.0
    %1148 = vmatprep.subr.mxu0 0.0
    %1149 = vmatpush2.msra.mxu0 0.0
    %1150 = vmatprep.subr.mxu0 0.0
    %1151 = vmatpush2.msra.mxu0 0.0
    %1152 = vmatprep.subr.mxu0 0.0
    %1153 = vmatpush2.msra.mxu0 0.0
    %1154 = vmatprep.subr.mxu0 0.0
    %1155 = vmatpush2.msra.mxu0 0.0
    %1156 = vmatprep.subr.mxu0 0.0
    %1157 = vmatpush2.msra.mxu0 0.0
    %1158 = vmatprep.subr.mxu0 0.0
    %1159 = vmatpush2.msra.mxu0 0.0
    %1160 = vmatprep.subr.mxu0 0.0
    %1161 = vmatpush2.msra.mxu0 0.0
    %1162 = vmatprep.subr.mxu0 0.0
    %1163 = vmatpush2.msra.mxu0 0.0
    %1164 = vmatprep.subr.mxu0 0.0
    %1165 = vmatpush2.msra.mxu0 0.0
    %1166 = vmatprep.subr.mxu0 0.0
    %1167 = vmatpush2.msra.mxu0 0.0
    %1168 = vmatprep.subr.mxu0 0.0
    %1169 = vmatpush2.msra.mxu0 0.0
    %1170 = vmatprep.subr.mxu0 0.0
    %1171 = vmatpush2.msra.mxu0 0.0
    %1172 = vmatprep.mubr.f32.mxu0 0.0
    %1173 = vmatmul.mubr.f32.gmra.mxu0 %v999
    %v1174 = vpop.f32.mrf.mxu0
    %v1175 = vadd.f32 %v1080, %v1174
    %v1176 = vpop.f32.mrf.mxu0
    %v1177 = vadd.f32 %v1082, %v1176
    %1178 = vmatprep.mubr.f32.mxu0 0.0
    %1179 = vmatmul.mubr.f32.gmra.mxu0 %v1002
    %v1180 = vpop.f32.mrf.mxu0
    %v1181 = vadd.f32 %v1086, %v1180
    %v1182 = vpop.f32.mrf.mxu0
    %v1183 = vadd.f32 %v1088, %v1182
    %1184 = vmatprep.mubr.f32.mxu0 0.0
    %1185 = vmatmul.mubr.f32.gmra.mxu0 %v1005
    %v1186 = vpop.f32.mrf.mxu0
    %v1187 = vadd.f32 %v1092, %v1186
    %v1188 = vpop.f32.mrf.mxu0
    %v1189 = vadd.f32 %v1094, %v1188
    %1190 = vmatprep.mubr.f32.mxu0 0.0
    %1191 = vmatmul.mubr.f32.gmra.mxu0 %v1008
    %v1192 = vpop.f32.mrf.mxu0
    %v1193 = vadd.f32 %v1098, %v1192
    %v1194 = vpop.f32.mrf.mxu0
    %v1195 = vadd.f32 %v1100, %v1194
    %1196 = vmatprep.mubr.f32.mxu0 0.0
    %1197 = vmatmul.mubr.f32.gmra.mxu0 %v1011
    %v1198 = vpop.f32.mrf.mxu0
    %v1199 = vadd.f32 %v1104, %v1198
    %v1200 = vpop.f32.mrf.mxu0
    %v1201 = vadd.f32 %v1106, %v1200
    %1202 = vdwg.mxu0
    %1203 = vmatprep.subr.mxu0 0.0
    %1204 = vmatpush1.msra.mxu0 %v123
    %1205 = vmatprep.subr.mxu0 0.0
    %1206 = vmatpush1.msra.mxu0 %v120
    %1207 = vmatprep.subr.mxu0 0.0
    %1208 = vmatpush1.msra.mxu0 %v117
    %1209 = vmatprep.subr.mxu0 0.0
    %1210 = vmatpush1.msra.mxu0 %v114
    %1211 = vmatprep.subr.mxu0 0.0
    %1212 = vmatpush1.msra.mxu0 %v111
    %1213 = vmatprep.subr.mxu0 0.0
    %1214 = vmatpush1.msra.mxu0 %v108
    %1215 = vmatprep.subr.mxu0 0.0
    %1216 = vmatpush1.msra.mxu0 %v105
    %1217 = vmatprep.subr.mxu0 0.0
    %1218 = vmatpush1.msra.mxu0 %v102
    %1219 = vmatprep.subr.mxu0 0.0
    %1220 = vmatpush1.msra.mxu0 %v99
    %1221 = vmatprep.subr.mxu0 0.0
    %1222 = vmatpush1.msra.mxu0 %v96
    %1223 = vmatprep.subr.mxu0 0.0
    %1224 = vmatpush1.msra.mxu0 %v93
    %1225 = vmatprep.subr.mxu0 0.0
    %1226 = vmatpush1.msra.mxu0 %v90
    %1227 = vmatprep.subr.mxu0 0.0
    %1228 = vmatpush1.msra.mxu0 %v87
    %1229 = vmatprep.subr.mxu0 0.0
    %1230 = vmatpush1.msra.mxu0 %v84
    %1231 = vmatprep.subr.mxu0 0.0
    %1232 = vmatpush1.msra.mxu0 %v81
    %1233 = vmatprep.subr.mxu0 0.0
    %1234 = vmatpush1.msra.mxu0 %v78
    %1235 = vmatprep.subr.mxu0 0.0
    %1236 = vmatpush2.msra.mxu0 %v171
    %1237 = vmatprep.subr.mxu0 0.0
    %1238 = vmatpush2.msra.mxu0 %v168
    %1239 = vmatprep.subr.mxu0 0.0
    %1240 = vmatpush2.msra.mxu0 %v165
    %1241 = vmatprep.subr.mxu0 0.0
    %1242 = vmatpush2.msra.mxu0 %v162
    %1243 = vmatprep.subr.mxu0 0.0
    %1244 = vmatpush2.msra.mxu0 %v159
    %1245 = vmatprep.subr.mxu0 0.0
    %1246 = vmatpush2.msra.mxu0 %v156
    %1247 = vmatprep.subr.mxu0 0.0
    %1248 = vmatpush2.msra.mxu0 %v153
    %1249 = vmatprep.subr.mxu0 0.0
    %1250 = vmatpush2.msra.mxu0 %v150
    %1251 = vmatprep.subr.mxu0 0.0
    %1252 = vmatpush2.msra.mxu0 %v147
    %1253 = vmatprep.subr.mxu0 0.0
    %1254 = vmatpush2.msra.mxu0 %v144
    %1255 = vmatprep.subr.mxu0 0.0
    %1256 = vmatpush2.msra.mxu0 %v141
    %1257 = vmatprep.subr.mxu0 0.0
    %1258 = vmatpush2.msra.mxu0 %v138
    %1259 = vmatprep.subr.mxu0 0.0
    %1260 = vmatpush2.msra.mxu0 %v135
    %1261 = vmatprep.subr.mxu0 0.0
    %1262 = vmatpush2.msra.mxu0 %v132
    %1263 = vmatprep.subr.mxu0 0.0
    %1264 = vmatpush2.msra.mxu0 %v129
    %1265 = vmatprep.subr.mxu0 0.0
    %1266 = vmatpush2.msra.mxu0 %v126
    %1267 = vmatprep.mubr.f32.mxu0 %v882
    %1268 = vmatmul.mubr.f32.gmra.mxu0 %v880
    %v1269 = vpop.f32.mrf.mxu0
    %v1270 = vadd.f32 0.0, %v1269
    %v1271 = vpop.f32.mrf.mxu0
    %1272 = vmatprep.mubr.f32.mxu0 %v888
    %1273 = vmatmul.mubr.f32.gmra.mxu0 %v886
    %v1274 = vpop.f32.mrf.mxu0
    %v1275 = vadd.f32 0.0, %v1274
    %v1276 = vpop.f32.mrf.mxu0
    %1277 = vmatprep.mubr.f32.mxu0 %v894
    %1278 = vmatmul.mubr.f32.gmra.mxu0 %v892
    %v1279 = vpop.f32.mrf.mxu0
    %v1280 = vadd.f32 0.0, %v1279
    %v1281 = vpop.f32.mrf.mxu0
    %1282 = vmatprep.mubr.f32.mxu0 %v900
    %1283 = vmatmul.mubr.f32.gmra.mxu0 %v898
    %v1284 = vpop.f32.mrf.mxu0
    %v1285 = vadd.f32 0.0, %v1284
    %v1286 = vpop.f32.mrf.mxu0
    %1287 = vmatprep.mubr.f32.mxu0 %v906
    %1288 = vmatmul.mubr.f32.gmra.mxu0 %v904
    %v1289 = vpop.f32.mrf.mxu0
    %v1290 = vadd.f32 0.0, %v1289
    %v1291 = vpop.f32.mrf.mxu0
    %1292 = vdwg.mxu0
    %1293 = vmatprep.subr.mxu0 0.0
    %1294 = vmatpush1.msra.mxu0 0.0
    %1295 = vmatprep.subr.mxu0 0.0
    %1296 = vmatpush1.msra.mxu0 0.0
    %1297 = vmatprep.subr.mxu0 0.0
    %1298 = vmatpush1.msra.mxu0 0.0
    %1299 = vmatprep.subr.mxu0 0.0
    %1300 = vmatpush1.msra.mxu0 0.0
    %1301 = vmatprep.subr.mxu0 0.0
    %1302 = vmatpush1.msra.mxu0 0.0
    %1303 = vmatprep.subr.mxu0 0.0
    %1304 = vmatpush1.msra.mxu0 0.0
    %1305 = vmatprep.subr.mxu0 0.0
    %1306 = vmatpush1.msra.mxu0 0.0
    %1307 = vmatprep.subr.mxu0 0.0
    %1308 = vmatpush1.msra.mxu0 0.0
    %1309 = vmatprep.subr.mxu0 0.0
    %1310 = vmatpush1.msra.mxu0 %v195
    %1311 = vmatprep.subr.mxu0 0.0
    %1312 = vmatpush1.msra.mxu0 %v192
    %1313 = vmatprep.subr.mxu0 0.0
    %1314 = vmatpush1.msra.mxu0 %v189
    %1315 = vmatprep.subr.mxu0 0.0
    %1316 = vmatpush1.msra.mxu0 %v186
    %1317 = vmatprep.subr.mxu0 0.0
    %1318 = vmatpush1.msra.mxu0 %v183
    %1319 = vmatprep.subr.mxu0 0.0
    %1320 = vmatpush1.msra.mxu0 %v180
    %1321 = vmatprep.subr.mxu0 0.0
    %1322 = vmatpush1.msra.mxu0 %v177
    %1323 = vmatprep.subr.mxu0 0.0
    %1324 = vmatpush1.msra.mxu0 %v174
    %1325 = vmatprep.subr.mxu0 0.0
    %1326 = vmatpush2.msra.mxu0 0.0
    %1327 = vmatprep.subr.mxu0 0.0
    %1328 = vmatpush2.msra.mxu0 0.0
    %1329 = vmatprep.subr.mxu0 0.0
    %1330 = vmatpush2.msra.mxu0 0.0
    %1331 = vmatprep.subr.mxu0 0.0
    %1332 = vmatpush2.msra.mxu0 0.0
    %1333 = vmatprep.subr.mxu0 0.0
    %1334 = vmatpush2.msra.mxu0 0.0
    %1335 = vmatprep.subr.mxu0 0.0
    %1336 = vmatpush2.msra.mxu0 0.0
    %1337 = vmatprep.subr.mxu0 0.0
    %1338 = vmatpush2.msra.mxu0 0.0
    %1339 = vmatprep.subr.mxu0 0.0
    %1340 = vmatpush2.msra.mxu0 0.0
    %1341 = vmatprep.subr.mxu0 0.0
    %1342 = vmatpush2.msra.mxu0 0.0
    %1343 = vmatprep.subr.mxu0 0.0
    %1344 = vmatpush2.msra.mxu0 0.0
    %1345 = vmatprep.subr.mxu0 0.0
    %1346 = vmatpush2.msra.mxu0 0.0
    %1347 = vmatprep.subr.mxu0 0.0
    %1348 = vmatpush2.msra.mxu0 0.0
    %1349 = vmatprep.subr.mxu0 0.0
    %1350 = vmatpush2.msra.mxu0 0.0
    %1351 = vmatprep.subr.mxu0 0.0
    %1352 = vmatpush2.msra.mxu0 0.0
    %1353 = vmatprep.subr.mxu0 0.0
    %1354 = vmatpush2.msra.mxu0 0.0
    %1355 = vmatprep.subr.mxu0 0.0
    %1356 = vmatpush2.msra.mxu0 0.0
    %1357 = vmatprep.mubr.f32.mxu0 0.0
    %1358 = vmatmul.mubr.f32.gmra.mxu0 %v999
    %v1359 = vpop.f32.mrf.mxu0
    %v1360 = vadd.f32 %v1270, %v1359
    %v1361 = vpop.f32.mrf.mxu0
    %1362 = vmatprep.mubr.f32.mxu0 0.0
    %1363 = vmatmul.mubr.f32.gmra.mxu0 %v1002
    %v1364 = vpop.f32.mrf.mxu0
    %v1365 = vadd.f32 %v1275, %v1364
    %v1366 = vpop.f32.mrf.mxu0
    %1367 = vmatprep.mubr.f32.mxu0 0.0
    %1368 = vmatmul.mubr.f32.gmra.mxu0 %v1005
    %v1369 = vpop.f32.mrf.mxu0
    %v1370 = vadd.f32 %v1280, %v1369
    %v1371 = vpop.f32.mrf.mxu0
    %1372 = vmatprep.mubr.f32.mxu0 0.0
    %1373 = vmatmul.mubr.f32.gmra.mxu0 %v1008
    %v1374 = vpop.f32.mrf.mxu0
    %v1375 = vadd.f32 %v1285, %v1374
    %v1376 = vpop.f32.mrf.mxu0
    %1377 = vmatprep.mubr.f32.mxu0 0.0
    %1378 = vmatmul.mubr.f32.gmra.mxu0 %v1011
    %v1379 = vpop.f32.mrf.mxu0
    %v1380 = vadd.f32 %v1290, %v1379
    %v1381 = vpop.f32.mrf.mxu0
    %1382 = vdwg.mxu0
    %v1383 = vrsqrt.pop %v1175
    %v1384 = vmul.f32 %v1175, %v1383
    %vm1385 = vcmp.eq.f32.partialorder %v1175, inf
    %v1386 = vsel %vm1385, %v1175, %v1384
    %vm1387 = vcmp.eq.f32.partialorder %v1175, 0.0
    %v1388 = vand.u32 %v1175, 2147483648
    %v1389 = vsel %vm1387, %v1388, %v1386
    %v1390 = vrsqrt.pop %v1177
    %v1391 = vmul.f32 %v1177, %v1390
    %vm1392 = vcmp.eq.f32.partialorder %v1177, inf
    %v1393 = vsel %vm1392, %v1177, %v1391
    %vm1394 = vcmp.eq.f32.partialorder %v1177, 0.0
    %v1395 = vand.u32 %v1177, 2147483648
    %v1396 = vsel %vm1394, %v1395, %v1393
    %v1397 = vrsqrt.pop %v1360
    %v1398 = vmul.f32 %v1360, %v1397
    %vm1399 = vcmp.eq.f32.partialorder %v1360, inf
    %v1400 = vsel %vm1399, %v1360, %v1398
    %vm1401 = vcmp.eq.f32.partialorder %v1360, 0.0
    %v1402 = vand.u32 %v1360, 2147483648
    %v1403 = vsel %vm1401, %v1402, %v1400
    %v1404 = vrsqrt.pop %v1181
    %v1405 = vmul.f32 %v1181, %v1404
    %vm1406 = vcmp.eq.f32.partialorder %v1181, inf
    %v1407 = vsel %vm1406, %v1181, %v1405
    %vm1408 = vcmp.eq.f32.partialorder %v1181, 0.0
    %v1409 = vand.u32 %v1181, 2147483648
    %v1410 = vsel %vm1408, %v1409, %v1407
    %v1411 = vrsqrt.pop %v1183
    %v1412 = vmul.f32 %v1183, %v1411
    %vm1413 = vcmp.eq.f32.partialorder %v1183, inf
    %v1414 = vsel %vm1413, %v1183, %v1412
    %vm1415 = vcmp.eq.f32.partialorder %v1183, 0.0
    %v1416 = vand.u32 %v1183, 2147483648
    %v1417 = vsel %vm1415, %v1416, %v1414
    %v1418 = vrsqrt.pop %v1365
    %v1419 = vmul.f32 %v1365, %v1418
    %vm1420 = vcmp.eq.f32.partialorder %v1365, inf
    %v1421 = vsel %vm1420, %v1365, %v1419
    %vm1422 = vcmp.eq.f32.partialorder %v1365, 0.0
    %v1423 = vand.u32 %v1365, 2147483648
    %v1424 = vsel %vm1422, %v1423, %v1421
    %v1425 = vrsqrt.pop %v1187
    %v1426 = vmul.f32 %v1187, %v1425
    %vm1427 = vcmp.eq.f32.partialorder %v1187, inf
    %v1428 = vsel %vm1427, %v1187, %v1426
    %vm1429 = vcmp.eq.f32.partialorder %v1187, 0.0
    %v1430 = vand.u32 %v1187, 2147483648
    %v1431 = vsel %vm1429, %v1430, %v1428
    %v1432 = vrsqrt.pop %v1189
    %v1433 = vmul.f32 %v1189, %v1432
    %vm1434 = vcmp.eq.f32.partialorder %v1189, inf
    %v1435 = vsel %vm1434, %v1189, %v1433
    %vm1436 = vcmp.eq.f32.partialorder %v1189, 0.0
    %v1437 = vand.u32 %v1189, 2147483648
    %v1438 = vsel %vm1436, %v1437, %v1435
    %v1439 = vrsqrt.pop %v1370
    %v1440 = vmul.f32 %v1370, %v1439
    %vm1441 = vcmp.eq.f32.partialorder %v1370, inf
    %v1442 = vsel %vm1441, %v1370, %v1440
    %vm1443 = vcmp.eq.f32.partialorder %v1370, 0.0
    %v1444 = vand.u32 %v1370, 2147483648
    %v1445 = vsel %vm1443, %v1444, %v1442
    %v1446 = vrsqrt.pop %v1193
    %v1447 = vmul.f32 %v1193, %v1446
    %vm1448 = vcmp.eq.f32.partialorder %v1193, inf
    %v1449 = vsel %vm1448, %v1193, %v1447
    %vm1450 = vcmp.eq.f32.partialorder %v1193, 0.0
    %v1451 = vand.u32 %v1193, 2147483648
    %v1452 = vsel %vm1450, %v1451, %v1449
    %v1453 = vrsqrt.pop %v1195
    %v1454 = vmul.f32 %v1195, %v1453
    %vm1455 = vcmp.eq.f32.partialorder %v1195, inf
    %v1456 = vsel %vm1455, %v1195, %v1454
    %vm1457 = vcmp.eq.f32.partialorder %v1195, 0.0
    %v1458 = vand.u32 %v1195, 2147483648
    %v1459 = vsel %vm1457, %v1458, %v1456
    %v1460 = vrsqrt.pop %v1375
    %v1461 = vmul.f32 %v1375, %v1460
    %vm1462 = vcmp.eq.f32.partialorder %v1375, inf
    %v1463 = vsel %vm1462, %v1375, %v1461
    %vm1464 = vcmp.eq.f32.partialorder %v1375, 0.0
    %v1465 = vand.u32 %v1375, 2147483648
    %v1466 = vsel %vm1464, %v1465, %v1463
    %v1467 = vrsqrt.pop %v1199
    %v1468 = vmul.f32 %v1199, %v1467
    %vm1469 = vcmp.eq.f32.partialorder %v1199, inf
    %v1470 = vsel %vm1469, %v1199, %v1468
    %vm1471 = vcmp.eq.f32.partialorder %v1199, 0.0
    %v1472 = vand.u32 %v1199, 2147483648
    %v1473 = vsel %vm1471, %v1472, %v1470
    %v1474 = vrsqrt.pop %v1201
    %v1475 = vmul.f32 %v1201, %v1474
    %vm1476 = vcmp.eq.f32.partialorder %v1201, inf
    %v1477 = vsel %vm1476, %v1201, %v1475
    %vm1478 = vcmp.eq.f32.partialorder %v1201, 0.0
    %v1479 = vand.u32 %v1201, 2147483648
    %v1480 = vsel %vm1478, %v1479, %v1477
    %v1481 = vrsqrt.pop %v1380
    %v1482 = vmul.f32 %v1380, %v1481
    %vm1483 = vcmp.eq.f32.partialorder %v1380, inf
    %v1484 = vsel %vm1483, %v1380, %v1482
    %vm1485 = vcmp.eq.f32.partialorder %v1380, 0.0
    %v1486 = vand.u32 %v1380, 2147483648
    %v1487 = vsel %vm1485, %v1486, %v1484
    %v1488 = vadd.f32 %v1389, 1e-08
    %v1489 = vadd.f32 %v1396, 1e-08
    %v1490 = vadd.f32 %v1403, 1e-08
    %v1491 = vadd.f32 %v1410, 1e-08
    %v1492 = vadd.f32 %v1417, 1e-08
    %v1493 = vadd.f32 %v1424, 1e-08
    %v1494 = vadd.f32 %v1431, 1e-08
    %v1495 = vadd.f32 %v1438, 1e-08
    %v1496 = vadd.f32 %v1445, 1e-08
    %v1497 = vadd.f32 %v1452, 1e-08
    %v1498 = vadd.f32 %v1459, 1e-08
    %v1499 = vadd.f32 %v1466, 1e-08
    %v1500 = vadd.f32 %v1473, 1e-08
    %v1501 = vadd.f32 %v1480, 1e-08
    %v1502 = vadd.f32 %v1487, 1e-08
    %v1503 = vrcp.pop %v1488
    %v1504 = vmul.f32 %v783, %v1503
    %v1505 = vrcp.pop %v1489
    %v1506 = vmul.f32 %v784, %v1505
    %v1507 = vrcp.pop %v1490
    %v1508 = vmul.f32 %v785, %v1507
    %v1509 = vrcp.pop %v1491
    %v1510 = vmul.f32 %v786, %v1509
    %v1511 = vrcp.pop %v1492
    %v1512 = vmul.f32 %v787, %v1511
    %v1513 = vrcp.pop %v1493
    %v1514 = vmul.f32 %v788, %v1513
    %v1515 = vrcp.pop %v1494
    %v1516 = vmul.f32 %v789, %v1515
    %v1517 = vrcp.pop %v1495
    %v1518 = vmul.f32 %v790, %v1517
    %v1519 = vrcp.pop %v1496
    %v1520 = vmul.f32 %v791, %v1519
    %v1521 = vrcp.pop %v1497
    %v1522 = vmul.f32 %v792, %v1521
    %v1523 = vrcp.pop %v1498
    %v1524 = vmul.f32 %v793, %v1523
    %v1525 = vrcp.pop %v1499
    %v1526 = vmul.f32 %v794, %v1525
    %v1527 = vrcp.pop %v1500
    %v1528 = vmul.f32 %v795, %v1527
    %v1529 = vrcp.pop %v1501
    %v1530 = vmul.f32 %v796, %v1529
    %v1531 = vrcp.pop %v1502
    %v1532 = vmul.f32 %v797, %v1531
    %1533 = vst [vmem:[#allocation8] sm:$0xff] %v1504
    %1534 = vst [vmem:[#allocation8 + $0x8] sm:$0xff] %v1506
    %1535 = vst.msk [vmem:[#allocation8 + $0x10] sm:$0xff] %vm397, %v1508
    %1536 = vst [vmem:[#allocation8 + $0x18] sm:$0xff] %v1510
    %1537 = vst [vmem:[#allocation8 + $0x20] sm:$0xff] %v1512
    %1538 = vst.msk [vmem:[#allocation8 + $0x28] sm:$0xff] %vm397, %v1514
    %1539 = vst [vmem:[#allocation8 + $0x30] sm:$0xff] %v1516
    %1540 = vst [vmem:[#allocation8 + $0x38] sm:$0xff] %v1518
    %1541 = vst.msk [vmem:[#allocation8 + $0x40] sm:$0xff] %vm397, %v1520
    %1542 = vst [vmem:[#allocation8 + $0x48] sm:$0xff] %v1522
    %1543 = vst [vmem:[#allocation8 + $0x50] sm:$0xff] %v1524
    %1544 = vst.msk [vmem:[#allocation8 + $0x58] sm:$0xff] %vm397, %v1526
    %1545 = vst [vmem:[#allocation8 + $0x60] sm:$0xff] %v1528
    %1546 = vst [vmem:[#allocation8 + $0x68] sm:$0xff] %v1530
    %1547 = vst.msk [vmem:[#allocation8 + $0x70] sm:$0xff] %vm397, %v1532
    // Predicated region
    $region26: #{tpu_custom_call.1} parent=1 // pred_check
      _
    $region27: #{tpu_custom_call.1} parent=1 // pred_check_branch
      %1549 = sbr.rel (0) target = $region29
    $region28: #{tpu_custom_call.1} parent=1 // pred_region
      %s1551 = ssub.s32 1920, 1920
      %1552 = vsyncadd [#allocation4], %s1551
      %s1553 = sshll.u32 [#allocation8], 4
      %s1554 = int_to_ptr.vmem [resolvable:$true] %s1553
      %1559 = dma.vmem_to_hbm [thread:$0]  %s1554, 1920, %s3, [#allocation4], 384, 384, 24
    $region29: #{tpu_custom_call.1} parent=1 // pred_fallthru
      _
    // Predicated region
    $region30: #{tpu_custom_call.1} parent=1 // pred_check
      _
    $region31: #{tpu_custom_call.1} parent=1 // pred_check_branch
      %1561 = sbr.rel (0) target = $region33
    $region32: #{tpu_custom_call.1} parent=1 // pred_region
      %1562 = dma.done [#allocation4], 1920
    $region33: #{tpu_custom_call.1} parent=1 // pred_fallthru
      _
    %1563 = vsyncpa [#allocation3], 1
    %1564 = vsyncpa [#allocation6], 1
    %1565 = vsyncpa [#allocation4], 1

</llo_original>
